<compile_context>
chip_gen: v6e
topology: v6e:2x2x1
jax: 0.10.0
libtpu: 0.0.40
codegen_flags: <defaults>
</compile_context>

<pallas_src>
import jax
import jax.numpy as jnp
from jax.experimental import pallas as pl

# ----------------------------- model config (small) -------------------------
VOCAB = 64
B = 2            # batch
S = 8            # sequence length
H = 32           # hidden size
NUM_HEADS = 2
HEAD_DIM = H // NUM_HEADS
INTER = 64       # FFN intermediate size
NUM_LAYERS = 2
LN_EPS = 1e-12

# packed per-layer small-vector table: rows x width
VEC_W = 3 * H    # widest packed vector (fused QKV bias)
(ROW_BQKV, ROW_BO, ROW_LN1G, ROW_LN1B,
 ROW_BI, ROW_BF, ROW_LN2G, ROW_LN2B) = range(8)
NUM_VEC_ROWS = 8


def _layer_norm(x, g, b):
    mu = jnp.mean(x, axis=-1, keepdims=True)
    var = jnp.mean((x - mu) ** 2, axis=-1, keepdims=True)
    return (x - mu) * jax.lax.rsqrt(var + LN_EPS) * g + b


def _split_heads(t2d):
    """(B*S, H) -> (NUM_HEADS*B, S, HEAD_DIM), head-major on the batch axis."""
    parts = [t2d[:, n * HEAD_DIM:(n + 1) * HEAD_DIM].reshape(B, S, HEAD_DIM)
             for n in range(NUM_HEADS)]
    return jnp.stack(parts, axis=0).reshape(NUM_HEADS * B, S, HEAD_DIM)


def _merge_heads(t3d):
    """(NUM_HEADS*B, S, HEAD_DIM) -> (B*S, H) with head-contiguous lanes."""
    t4 = t3d.reshape(NUM_HEADS, B, S, HEAD_DIM)
    return jnp.concatenate([t4[n] for n in range(NUM_HEADS)],
                           axis=-1).reshape(B * S, H)


# ---------------- Pallas kernel: full model, single invocation ---------------
def fused_bert_kernel(x_ref, mask_ref,
                      wqkv_ref, wo_ref, wi_ref, wf_ref, vec_ref,
                      whead_ref, bhead_ref, out_ref):
    x2d = x_ref[...].reshape(B * S, H)          # (B*S, H) f32 activations
    amask = mask_ref[...]                       # (NUM_HEADS*B, 1, S) additive mask
    scale = 1.0 / (HEAD_DIM ** 0.5)

    # Static unroll over layers: weights stay resident in VMEM, no HBM traffic
    # between layers.
    for l in range(NUM_LAYERS):
        vec = vec_ref[l]                        # (NUM_VEC_ROWS, VEC_W) packed vectors
        bqkv = vec[ROW_BQKV:ROW_BQKV + 1, :]    # (1, 3H)
        bo = vec[ROW_BO:ROW_BO + 1, :H]
        ln1g = vec[ROW_LN1G:ROW_LN1G + 1, :H]
        ln1b = vec[ROW_LN1B:ROW_LN1B + 1, :H]
        bi = vec[ROW_BI:ROW_BI + 1, :INTER]
        bf = vec[ROW_BF:ROW_BF + 1, :H]
        ln2g = vec[ROW_LN2G:ROW_LN2G + 1, :H]
        ln2b = vec[ROW_LN2B:ROW_LN2B + 1, :H]

        # Fused QKV projection: one MXU matmul instead of three.
        qkv = jnp.dot(x2d.astype(jnp.bfloat16), wqkv_ref[l],
                      preferred_element_type=jnp.float32) + bqkv   # (B*S, 3H)

        q_h = _split_heads(qkv[:, :H])
        k_h = _split_heads(qkv[:, H:2 * H])
        v_h = _split_heads(qkv[:, 2 * H:])

        # All heads & batch elements in one batched contraction each.
        scores = jnp.einsum('bqd,bkd->bqk',
                            q_h.astype(jnp.bfloat16), k_h.astype(jnp.bfloat16),
                            preferred_element_type=jnp.float32) * scale
        scores = scores + amask                 # (NH*B, S, S) + (NH*B, 1, S)
        scores = scores - jnp.max(scores, axis=-1, keepdims=True)
        p = jnp.exp(scores)
        p = p * pl.reciprocal(jnp.sum(p, axis=-1, keepdims=True), approx=True)
        ctx_h = jnp.einsum('bqk,bkd->bqd',
                           p.astype(jnp.bfloat16), v_h.astype(jnp.bfloat16),
                           preferred_element_type=jnp.float32)
        ctx = _merge_heads(ctx_h)               # (B*S, H)

        attn_out = jnp.dot(ctx.astype(jnp.bfloat16), wo_ref[l],
                           preferred_element_type=jnp.float32) + bo
        h1 = _layer_norm(x2d + attn_out, ln1g, ln1b)

        inter = jnp.dot(h1.astype(jnp.bfloat16), wi_ref[l],
                        preferred_element_type=jnp.float32) + bi
        # TODO(synk): tanh-approx GELU; PyTorch's default exact erf-GELU differs slightly.
        inter = jax.nn.gelu(inter, approximate=True)
        ffn = jnp.dot(inter.astype(jnp.bfloat16), wf_ref[l],
                      preferred_element_type=jnp.float32) + bf
        x2d = _layer_norm(h1 + ffn, ln2g, ln2b)

    # ------- pooler on [CLS] + Dropout(0.3)==identity at inference + heads -------
    cls = jnp.concatenate([x2d[b * S:b * S + 1, :] for b in range(B)], axis=0)  # (B, H)
    whead = whead_ref[...]                      # (H, H+2) bf16: [pooler W | fc1 w | fc2 w]
    bhead = bhead_ref[...]                      # (1, H+2) f32
    pooled = jnp.tanh(jnp.dot(cls.astype(jnp.bfloat16), whead[:, :H],
                              preferred_element_type=jnp.float32) + bhead[:, :H])
    # Both classification heads as a single (H, 2) matmul -> one (B, 2) store.
    out_ref[...] = jnp.dot(pooled.astype(jnp.bfloat16), whead[:, H:],
                           preferred_element_type=jnp.float32) + bhead[:, H:]


def fused_forward(x_emb, mask_hb, params):
    """Single pallas_call, no grid: whole arrays resident in VMEM (default specs)."""
    return pl.pallas_call(
        fused_bert_kernel,
        out_shape=jax.ShapeDtypeStruct((B, 2), jnp.float32),
    )(x_emb, mask_hb,
      params["wqkv"], params["wo"], params["wi"], params["wf"],
      params["vecs"], params["whead"], params["bhead"])


# --------------------------- parameter initialization ------------------------
def init_params(key):
    std = 0.02
    ks = iter(jax.random.split(key, 16))
    nrm = lambda shape: (std * jax.random.normal(next(ks), shape)).astype(jnp.float32)

    # packed per-layer biases / LayerNorm params (f32); only LN gammas are non-zero
    vecs = jnp.zeros((NUM_LAYERS, NUM_VEC_ROWS, VEC_W), jnp.float32)
    vecs = vecs.at[:, ROW_LN1G, :H].set(1.0)
    vecs = vecs.at[:, ROW_LN2G, :H].set(1.0)

    # pooler weight, fc1 weight, fc2 weight packed column-wise -> (H, H+2)
    whead = jnp.concatenate([nrm((H, H)), nrm((H, 1)), nrm((H, 1))], axis=1)

    return {
        "word_emb": nrm((VOCAB, H)),
        "pos_emb": nrm((S, H)),
        "type_emb": nrm((2, H)),
        "emb_lng": jnp.ones((1, H), jnp.float32),
        "emb_lnb": jnp.zeros((1, H), jnp.float32),
        # per-layer weights stacked on a leading NUM_LAYERS axis; bf16 MXU operands
        "wqkv": nrm((NUM_LAYERS, H, 3 * H)).astype(jnp.bfloat16),
        "wo": nrm((NUM_LAYERS, H, H)).astype(jnp.bfloat16),
        "wi": nrm((NUM_LAYERS, H, INTER)).astype(jnp.bfloat16),
        "wf": nrm((NUM_LAYERS, INTER, H)).astype(jnp.bfloat16),
        "vecs": vecs,
        "whead": whead.astype(jnp.bfloat16),
        "bhead": jnp.zeros((1, H + 2), jnp.float32),   # [pooler b | fc1 b | fc2 b]
    }


# ------------------------------- full forward --------------------------------
@jax.jit
def indic_bert_classifier_forward(params, input_ids, attention_mask):
    # embeddings (plain-JAX glue: gather + add + layernorm)
    x = (params["word_emb"][input_ids]
         + params["pos_emb"][None, :, :]
         + params["type_emb"][0][None, None, :])                    # (B, S, H)
    x = _layer_norm(x, params["emb_lng"], params["emb_lnb"]).astype(jnp.float32)

    # BERT-style additive mask (0 attend / -10000 pad), replicated per head:
    # row index n*B + b matches the kernel's head-batched layout.
    add_mask = (1.0 - attention_mask.astype(jnp.float32)) * -10000.0   # (B, S)
    mask_hb = jnp.tile(add_mask, (NUM_HEADS, 1))[:, None, :]           # (NH*B, 1, S)

    logits = fused_forward(x, mask_hb, params)                         # (B, 2)
    return logits[:, 0], logits[:, 1]        # fc1(.).squeeze(-1), fc2(.).squeeze(-1)


if __name__ == "__main__":
    key = jax.random.PRNGKey(0)
    pkey, ikey = jax.random.split(key)
    params = init_params(pkey)

    input_ids = jax.random.randint(ikey, (B, S), 0, VOCAB, dtype=jnp.int32)
    attention_mask = jnp.ones((B, S), dtype=jnp.int32).at[1, -2:].set(0)  # pad tail of ex.1

    out1, out2 = indic_bert_classifier_forward(params, input_ids, attention_mask)
    jax.block_until_ready((out1, out2))
    assert out1.shape == (B,) and out2.shape == (B,)
    assert bool(jnp.all(jnp.isfinite(out1))) and bool(jnp.all(jnp.isfinite(out2)))
    print("KERNEL_OK")
</pallas_src>

<mosaic_0001>
module attributes {stable_mosaic.version = 11 : i64} {
  func.func @fused_bert_kernel(%arg0: memref<2x8x32xf32, #tpu.memory_space<vmem>>, %arg1: memref<4x1x8xf32, #tpu.memory_space<vmem>>, %arg2: memref<2x32x96xbf16, #tpu.memory_space<vmem>>, %arg3: memref<2x32x32xbf16, #tpu.memory_space<vmem>>, %arg4: memref<2x32x64xbf16, #tpu.memory_space<vmem>>, %arg5: memref<2x64x32xbf16, #tpu.memory_space<vmem>>, %arg6: memref<2x8x96xf32, #tpu.memory_space<vmem>>, %arg7: memref<32x34xbf16, #tpu.memory_space<vmem>>, %arg8: memref<1x34xf32, #tpu.memory_space<vmem>>, %arg9: memref<2x2xf32, #tpu.memory_space<vmem>>) attributes {dimension_semantics = [], scalar_prefetch = 0 : i64, scratch_operands = 0 : i64, tpu.core_type = #tpu.core_type<tc>} {
    %c0 = arith.constant 0 : index
    %c0_0 = arith.constant 0 : index
    %c0_1 = arith.constant 0 : index
    %0 = vector.load %arg0[%c0, %c0_0, %c0_1] : memref<2x8x32xf32, #tpu.memory_space<vmem>>, vector<2x8x32xf32>
    %1 = vector.shape_cast %0 : vector<2x8x32xf32> to vector<16x32xf32>
    %c0_2 = arith.constant 0 : index
    %c0_3 = arith.constant 0 : index
    %c0_4 = arith.constant 0 : index
    %2 = vector.load %arg1[%c0_2, %c0_3, %c0_4] : memref<4x1x8xf32, #tpu.memory_space<vmem>>, vector<4x1x8xf32>
    %c0_5 = arith.constant 0 : index
    %c0_6 = arith.constant 0 : index
    %c0_7 = arith.constant 0 : index
    %3 = vector.load %arg6[%c0_5, %c0_6, %c0_7] : memref<2x8x96xf32, #tpu.memory_space<vmem>>, vector<1x8x96xf32>
    %4 = vector.shape_cast %3 : vector<1x8x96xf32> to vector<8x96xf32>
    %5 = vector.extract_strided_slice %4 {offsets = [0, 0], sizes = [1, 96], strides = [1, 1]} : vector<8x96xf32> to vector<1x96xf32>
    %6 = vector.extract_strided_slice %4 {offsets = [1, 0], sizes = [1, 32], strides = [1, 1]} : vector<8x96xf32> to vector<1x32xf32>
    %7 = vector.extract_strided_slice %4 {offsets = [2, 0], sizes = [1, 32], strides = [1, 1]} : vector<8x96xf32> to vector<1x32xf32>
    %8 = vector.extract_strided_slice %4 {offsets = [3, 0], sizes = [1, 32], strides = [1, 1]} : vector<8x96xf32> to vector<1x32xf32>
    %9 = vector.extract_strided_slice %4 {offsets = [4, 0], sizes = [1, 64], strides = [1, 1]} : vector<8x96xf32> to vector<1x64xf32>
    %10 = vector.extract_strided_slice %4 {offsets = [5, 0], sizes = [1, 32], strides = [1, 1]} : vector<8x96xf32> to vector<1x32xf32>
    %11 = vector.extract_strided_slice %4 {offsets = [6, 0], sizes = [1, 32], strides = [1, 1]} : vector<8x96xf32> to vector<1x32xf32>
    %12 = vector.extract_strided_slice %4 {offsets = [7, 0], sizes = [1, 32], strides = [1, 1]} : vector<8x96xf32> to vector<1x32xf32>
    %13 = arith.truncf %1 : vector<16x32xf32> to vector<16x32xbf16>
    %c0_8 = arith.constant 0 : index
    %c0_9 = arith.constant 0 : index
    %c0_10 = arith.constant 0 : index
    %14 = vector.load %arg2[%c0_8, %c0_9, %c0_10] : memref<2x32x96xbf16, #tpu.memory_space<vmem>>, vector<1x32x96xbf16>
    %15 = vector.shape_cast %14 : vector<1x32x96xbf16> to vector<32x96xbf16>
    %cst = arith.constant dense<0.000000e+00> : vector<16x96xf32>
    %16 = tpu.matmul %13, %15, %cst {dimension_numbers = #tpu.dot_dimension_numbers<[1], [0], [0], [1], [0, 0, 1, 1], [], []>} : vector<16x32xbf16>, vector<32x96xbf16>, vector<16x96xf32> -> vector<16x96xf32>
    %17 = vector.broadcast %5 : vector<1x96xf32> to vector<16x96xf32>
    %18 = arith.addf %16, %17 : vector<16x96xf32>
    %19 = vector.extract_strided_slice %18 {offsets = [0, 0], sizes = [16, 32], strides = [1, 1]} : vector<16x96xf32> to vector<16x32xf32>
    %20 = vector.extract_strided_slice %19 {offsets = [0, 0], sizes = [16, 16], strides = [1, 1]} : vector<16x32xf32> to vector<16x16xf32>
    %21 = vector.shape_cast %20 : vector<16x16xf32> to vector<2x8x16xf32>
    %22 = vector.extract_strided_slice %19 {offsets = [0, 16], sizes = [16, 16], strides = [1, 1]} : vector<16x32xf32> to vector<16x16xf32>
    %23 = vector.shape_cast %22 : vector<16x16xf32> to vector<2x8x16xf32>
    %24 = vector.shape_cast %21 : vector<2x8x16xf32> to vector<1x2x8x16xf32>
    %25 = vector.shape_cast %23 : vector<2x8x16xf32> to vector<1x2x8x16xf32>
    %26 = tpu.concatenate %24, %25 in 0 : vector<1x2x8x16xf32>, vector<1x2x8x16xf32> -> vector<2x2x8x16xf32>
    %27 = vector.shape_cast %26 : vector<2x2x8x16xf32> to vector<4x8x16xf32>
    %28 = vector.extract_strided_slice %18 {offsets = [0, 32], sizes = [16, 32], strides = [1, 1]} : vector<16x96xf32> to vector<16x32xf32>
    %29 = vector.extract_strided_slice %28 {offsets = [0, 0], sizes = [16, 16], strides = [1, 1]} : vector<16x32xf32> to vector<16x16xf32>
    %30 = vector.shape_cast %29 : vector<16x16xf32> to vector<2x8x16xf32>
    %31 = vector.extract_strided_slice %28 {offsets = [0, 16], sizes = [16, 16], strides = [1, 1]} : vector<16x32xf32> to vector<16x16xf32>
    %32 = vector.shape_cast %31 : vector<16x16xf32> to vector<2x8x16xf32>
    %33 = vector.shape_cast %30 : vector<2x8x16xf32> to vector<1x2x8x16xf32>
    %34 = vector.shape_cast %32 : vector<2x8x16xf32> to vector<1x2x8x16xf32>
    %35 = tpu.concatenate %33, %34 in 0 : vector<1x2x8x16xf32>, vector<1x2x8x16xf32> -> vector<2x2x8x16xf32>
    %36 = vector.shape_cast %35 : vector<2x2x8x16xf32> to vector<4x8x16xf32>
    %37 = vector.extract_strided_slice %18 {offsets = [0, 64], sizes = [16, 32], strides = [1, 1]} : vector<16x96xf32> to vector<16x32xf32>
    %38 = vector.extract_strided_slice %37 {offsets = [0, 0], sizes = [16, 16], strides = [1, 1]} : vector<16x32xf32> to vector<16x16xf32>
    %39 = vector.shape_cast %38 : vector<16x16xf32> to vector<2x8x16xf32>
    %40 = vector.extract_strided_slice %37 {offsets = [0, 16], sizes = [16, 16], strides = [1, 1]} : vector<16x32xf32> to vector<16x16xf32>
    %41 = vector.shape_cast %40 : vector<16x16xf32> to vector<2x8x16xf32>
    %42 = vector.shape_cast %39 : vector<2x8x16xf32> to vector<1x2x8x16xf32>
    %43 = vector.shape_cast %41 : vector<2x8x16xf32> to vector<1x2x8x16xf32>
    %44 = tpu.concatenate %42, %43 in 0 : vector<1x2x8x16xf32>, vector<1x2x8x16xf32> -> vector<2x2x8x16xf32>
    %45 = vector.shape_cast %44 : vector<2x2x8x16xf32> to vector<4x8x16xf32>
    %46 = arith.truncf %27 : vector<4x8x16xf32> to vector<4x8x16xbf16>
    %47 = arith.truncf %36 : vector<4x8x16xf32> to vector<4x8x16xbf16>
    "tpu.trace_start"() <{level = 10 : i32, message = "bqd,bkd->bqk"}> : () -> ()
    %cst_11 = arith.constant dense<0.000000e+00> : vector<4x8x8xf32>
    %48 = tpu.matmul %46, %47, %cst_11 {dimension_numbers = #tpu.dot_dimension_numbers<[2], [2], [1], [1], [0, 0, 0, 1, 1, 1], [0], [0]>} : vector<4x8x16xbf16>, vector<4x8x16xbf16>, vector<4x8x8xf32> -> vector<4x8x8xf32>
    "tpu.trace_stop"() : () -> ()
    %cst_12 = arith.constant 2.500000e-01 : f32
    %49 = vector.broadcast %cst_12 : f32 to vector<4x8x8xf32>
    %50 = arith.mulf %48, %49 : vector<4x8x8xf32>
    %51 = vector.broadcast %2 : vector<4x1x8xf32> to vector<4x8x8xf32>
    %52 = arith.addf %50, %51 : vector<4x8x8xf32>
    %cst_13 = arith.constant dense<0xFF800000> : vector<4x8xf32>
    %53 = vector.multi_reduction <maximumf>, %52, %cst_13 [2] : vector<4x8x8xf32> to vector<4x8xf32>
    %54 = vector.shape_cast %53 : vector<4x8xf32> to vector<4x8x1xf32>
    %55 = vector.broadcast %54 : vector<4x8x1xf32> to vector<4x8x8xf32>
    %56 = arith.subf %52, %55 : vector<4x8x8xf32>
    %57 = math.exp %56 : vector<4x8x8xf32>
    %cst_14 = arith.constant dense<0.000000e+00> : vector<4x8xf32>
    %58 = vector.multi_reduction <add>, %57, %cst_14 [2] : vector<4x8x8xf32> to vector<4x8xf32>
    %59 = vector.shape_cast %58 : vector<4x8xf32> to vector<4x8x1xf32>
    %60 = tpu.reciprocal %59 {approx = true} : vector<4x8x1xf32> -> vector<4x8x1xf32>
    %61 = vector.broadcast %60 : vector<4x8x1xf32> to vector<4x8x8xf32>
    %62 = arith.mulf %57, %61 : vector<4x8x8xf32>
    %63 = arith.truncf %62 : vector<4x8x8xf32> to vector<4x8x8xbf16>
    %64 = arith.truncf %45 : vector<4x8x16xf32> to vector<4x8x16xbf16>
    "tpu.trace_start"() <{level = 10 : i32, message = "bqk,bkd->bqd"}> : () -> ()
    %cst_15 = arith.constant dense<0.000000e+00> : vector<4x8x16xf32>
    %65 = tpu.matmul %63, %64, %cst_15 {dimension_numbers = #tpu.dot_dimension_numbers<[2], [1], [1], [2], [0, 0, 0, 1, 1, 2], [0], [0]>} : vector<4x8x8xbf16>, vector<4x8x16xbf16>, vector<4x8x16xf32> -> vector<4x8x16xf32>
    "tpu.trace_stop"() : () -> ()
    %66 = vector.shape_cast %65 : vector<4x8x16xf32> to vector<2x2x8x16xf32>
    %67 = vector.extract_strided_slice %66 {offsets = [0, 0, 0, 0], sizes = [1, 2, 8, 16], strides = [1, 1, 1, 1]} : vector<2x2x8x16xf32> to vector<1x2x8x16xf32>
    %68 = vector.shape_cast %67 : vector<1x2x8x16xf32> to vector<2x8x16xf32>
    %69 = vector.extract_strided_slice %66 {offsets = [1, 0, 0, 0], sizes = [1, 2, 8, 16], strides = [1, 1, 1, 1]} : vector<2x2x8x16xf32> to vector<1x2x8x16xf32>
    %70 = vector.shape_cast %69 : vector<1x2x8x16xf32> to vector<2x8x16xf32>
    %71 = tpu.concatenate %68, %70 in 2 : vector<2x8x16xf32>, vector<2x8x16xf32> -> vector<2x8x32xf32>
    %72 = vector.shape_cast %71 : vector<2x8x32xf32> to vector<16x32xf32>
    %73 = arith.truncf %72 : vector<16x32xf32> to vector<16x32xbf16>
    %c0_16 = arith.constant 0 : index
    %c0_17 = arith.constant 0 : index
    %c0_18 = arith.constant 0 : index
    %74 = vector.load %arg3[%c0_16, %c0_17, %c0_18] : memref<2x32x32xbf16, #tpu.memory_space<vmem>>, vector<1x32x32xbf16>
    %75 = vector.shape_cast %74 : vector<1x32x32xbf16> to vector<32x32xbf16>
    %cst_19 = arith.constant dense<0.000000e+00> : vector<16x32xf32>
    %76 = tpu.matmul %73, %75, %cst_19 {dimension_numbers = #tpu.dot_dimension_numbers<[1], [0], [0], [1], [0, 0, 1, 1], [], []>} : vector<16x32xbf16>, vector<32x32xbf16>, vector<16x32xf32> -> vector<16x32xf32>
    %77 = vector.broadcast %6 : vector<1x32xf32> to vector<16x32xf32>
    %78 = arith.addf %76, %77 : vector<16x32xf32>
    %79 = arith.addf %1, %78 : vector<16x32xf32>
    %cst_20 = arith.constant dense<0.000000e+00> : vector<16xf32>
    %80 = vector.multi_reduction <add>, %79, %cst_20 [1] : vector<16x32xf32> to vector<16xf32>
    %81 = vector.shape_cast %80 : vector<16xf32> to vector<16x1xf32>
    %cst_21 = arith.constant 3.200000e+01 : f32
    %82 = vector.broadcast %cst_21 : f32 to vector<16x1xf32>
    %83 = arith.divf %81, %82 : vector<16x1xf32>
    %84 = vector.broadcast %83 : vector<16x1xf32> to vector<16x32xf32>
    %85 = arith.subf %79, %84 : vector<16x32xf32>
    %86 = arith.mulf %85, %85 : vector<16x32xf32>
    %cst_22 = arith.constant dense<0.000000e+00> : vector<16xf32>
    %87 = vector.multi_reduction <add>, %86, %cst_22 [1] : vector<16x32xf32> to vector<16xf32>
    %88 = vector.shape_cast %87 : vector<16xf32> to vector<16x1xf32>
    %cst_23 = arith.constant 3.200000e+01 : f32
    %89 = vector.broadcast %cst_23 : f32 to vector<16x1xf32>
    %90 = arith.divf %88, %89 : vector<16x1xf32>
    %91 = vector.broadcast %83 : vector<16x1xf32> to vector<16x32xf32>
    %92 = arith.subf %79, %91 : vector<16x32xf32>
    %cst_24 = arith.constant 9.99999996E-13 : f32
    %93 = vector.broadcast %cst_24 : f32 to vector<16x1xf32>
    %94 = arith.addf %90, %93 : vector<16x1xf32>
    %95 = math.rsqrt %94 : vector<16x1xf32>
    %96 = vector.broadcast %95 : vector<16x1xf32> to vector<16x32xf32>
    %97 = arith.mulf %92, %96 : vector<16x32xf32>
    %98 = vector.broadcast %7 : vector<1x32xf32> to vector<16x32xf32>
    %99 = arith.mulf %97, %98 : vector<16x32xf32>
    %100 = vector.broadcast %8 : vector<1x32xf32> to vector<16x32xf32>
    %101 = arith.addf %99, %100 : vector<16x32xf32>
    %102 = arith.truncf %101 : vector<16x32xf32> to vector<16x32xbf16>
    %c0_25 = arith.constant 0 : index
    %c0_26 = arith.constant 0 : index
    %c0_27 = arith.constant 0 : index
    %103 = vector.load %arg4[%c0_25, %c0_26, %c0_27] : memref<2x32x64xbf16, #tpu.memory_space<vmem>>, vector<1x32x64xbf16>
    %104 = vector.shape_cast %103 : vector<1x32x64xbf16> to vector<32x64xbf16>
    %cst_28 = arith.constant dense<0.000000e+00> : vector<16x64xf32>
    %105 = tpu.matmul %102, %104, %cst_28 {dimension_numbers = #tpu.dot_dimension_numbers<[1], [0], [0], [1], [0, 0, 1, 1], [], []>} : vector<16x32xbf16>, vector<32x64xbf16>, vector<16x64xf32> -> vector<16x64xf32>
    %106 = vector.broadcast %9 : vector<1x64xf32> to vector<16x64xf32>
    %107 = arith.addf %105, %106 : vector<16x64xf32>
    %108 = arith.mulf %107, %107 : vector<16x64xf32>
    %109 = arith.mulf %107, %108 : vector<16x64xf32>
    %cst_29 = arith.constant 4.471500e-02 : f32
    %110 = vector.broadcast %cst_29 : f32 to vector<16x64xf32>
    %111 = arith.mulf %110, %109 : vector<16x64xf32>
    %112 = arith.addf %107, %111 : vector<16x64xf32>
    %cst_30 = arith.constant 0.797884583 : f32
    %113 = vector.broadcast %cst_30 : f32 to vector<16x64xf32>
    %114 = arith.mulf %113, %112 : vector<16x64xf32>
    %115 = math.tanh %114 : vector<16x64xf32>
    %cst_31 = arith.constant 1.000000e+00 : f32
    %116 = vector.broadcast %cst_31 : f32 to vector<16x64xf32>
    %117 = arith.addf %116, %115 : vector<16x64xf32>
    %cst_32 = arith.constant 5.000000e-01 : f32
    %118 = vector.broadcast %cst_32 : f32 to vector<16x64xf32>
    %119 = arith.mulf %118, %117 : vector<16x64xf32>
    %120 = arith.mulf %107, %119 : vector<16x64xf32>
    %121 = arith.truncf %120 : vector<16x64xf32> to vector<16x64xbf16>
    %c0_33 = arith.constant 0 : index
    %c0_34 = arith.constant 0 : index
    %c0_35 = arith.constant 0 : index
    %122 = vector.load %arg5[%c0_33, %c0_34, %c0_35] : memref<2x64x32xbf16, #tpu.memory_space<vmem>>, vector<1x64x32xbf16>
    %123 = vector.shape_cast %122 : vector<1x64x32xbf16> to vector<64x32xbf16>
    %cst_36 = arith.constant dense<0.000000e+00> : vector<16x32xf32>
    %124 = tpu.matmul %121, %123, %cst_36 {dimension_numbers = #tpu.dot_dimension_numbers<[1], [0], [0], [1], [0, 0, 1, 1], [], []>} : vector<16x64xbf16>, vector<64x32xbf16>, vector<16x32xf32> -> vector<16x32xf32>
    %125 = vector.broadcast %10 : vector<1x32xf32> to vector<16x32xf32>
    %126 = arith.addf %124, %125 : vector<16x32xf32>
    %127 = arith.addf %101, %126 : vector<16x32xf32>
    %cst_37 = arith.constant dense<0.000000e+00> : vector<16xf32>
    %128 = vector.multi_reduction <add>, %127, %cst_37 [1] : vector<16x32xf32> to vector<16xf32>
    %129 = vector.shape_cast %128 : vector<16xf32> to vector<16x1xf32>
    %cst_38 = arith.constant 3.200000e+01 : f32
    %130 = vector.broadcast %cst_38 : f32 to vector<16x1xf32>
    %131 = arith.divf %129, %130 : vector<16x1xf32>
    %132 = vector.broadcast %131 : vector<16x1xf32> to vector<16x32xf32>
    %133 = arith.subf %127, %132 : vector<16x32xf32>
    %134 = arith.mulf %133, %133 : vector<16x32xf32>
    %cst_39 = arith.constant dense<0.000000e+00> : vector<16xf32>
    %135 = vector.multi_reduction <add>, %134, %cst_39 [1] : vector<16x32xf32> to vector<16xf32>
    %136 = vector.shape_cast %135 : vector<16xf32> to vector<16x1xf32>
    %cst_40 = arith.constant 3.200000e+01 : f32
    %137 = vector.broadcast %cst_40 : f32 to vector<16x1xf32>
    %138 = arith.divf %136, %137 : vector<16x1xf32>
    %139 = vector.broadcast %131 : vector<16x1xf32> to vector<16x32xf32>
    %140 = arith.subf %127, %139 : vector<16x32xf32>
    %cst_41 = arith.constant 9.99999996E-13 : f32
    %141 = vector.broadcast %cst_41 : f32 to vector<16x1xf32>
    %142 = arith.addf %138, %141 : vector<16x1xf32>
    %143 = math.rsqrt %142 : vector<16x1xf32>
    %144 = vector.broadcast %143 : vector<16x1xf32> to vector<16x32xf32>
    %145 = arith.mulf %140, %144 : vector<16x32xf32>
    %146 = vector.broadcast %11 : vector<1x32xf32> to vector<16x32xf32>
    %147 = arith.mulf %145, %146 : vector<16x32xf32>
    %148 = vector.broadcast %12 : vector<1x32xf32> to vector<16x32xf32>
    %149 = arith.addf %147, %148 : vector<16x32xf32>
    %c1 = arith.constant 1 : index
    %c0_42 = arith.constant 0 : index
    %c0_43 = arith.constant 0 : index
    %150 = vector.load %arg6[%c1, %c0_42, %c0_43] : memref<2x8x96xf32, #tpu.memory_space<vmem>>, vector<1x8x96xf32>
    %151 = vector.shape_cast %150 : vector<1x8x96xf32> to vector<8x96xf32>
    %152 = vector.extract_strided_slice %151 {offsets = [0, 0], sizes = [1, 96], strides = [1, 1]} : vector<8x96xf32> to vector<1x96xf32>
    %153 = vector.extract_strided_slice %151 {offsets = [1, 0], sizes = [1, 32], strides = [1, 1]} : vector<8x96xf32> to vector<1x32xf32>
    %154 = vector.extract_strided_slice %151 {offsets = [2, 0], sizes = [1, 32], strides = [1, 1]} : vector<8x96xf32> to vector<1x32xf32>
    %155 = vector.extract_strided_slice %151 {offsets = [3, 0], sizes = [1, 32], strides = [1, 1]} : vector<8x96xf32> to vector<1x32xf32>
    %156 = vector.extract_strided_slice %151 {offsets = [4, 0], sizes = [1, 64], strides = [1, 1]} : vector<8x96xf32> to vector<1x64xf32>
    %157 = vector.extract_strided_slice %151 {offsets = [5, 0], sizes = [1, 32], strides = [1, 1]} : vector<8x96xf32> to vector<1x32xf32>
    %158 = vector.extract_strided_slice %151 {offsets = [6, 0], sizes = [1, 32], strides = [1, 1]} : vector<8x96xf32> to vector<1x32xf32>
    %159 = vector.extract_strided_slice %151 {offsets = [7, 0], sizes = [1, 32], strides = [1, 1]} : vector<8x96xf32> to vector<1x32xf32>
    %160 = arith.truncf %149 : vector<16x32xf32> to vector<16x32xbf16>
    %c1_44 = arith.constant 1 : index
    %c0_45 = arith.constant 0 : index
    %c0_46 = arith.constant 0 : index
    %161 = vector.load %arg2[%c1_44, %c0_45, %c0_46] : memref<2x32x96xbf16, #tpu.memory_space<vmem>>, vector<1x32x96xbf16>
    %162 = vector.shape_cast %161 : vector<1x32x96xbf16> to vector<32x96xbf16>
    %cst_47 = arith.constant dense<0.000000e+00> : vector<16x96xf32>
    %163 = tpu.matmul %160, %162, %cst_47 {dimension_numbers = #tpu.dot_dimension_numbers<[1], [0], [0], [1], [0, 0, 1, 1], [], []>} : vector<16x32xbf16>, vector<32x96xbf16>, vector<16x96xf32> -> vector<16x96xf32>
    %164 = vector.broadcast %152 : vector<1x96xf32> to vector<16x96xf32>
    %165 = arith.addf %163, %164 : vector<16x96xf32>
    %166 = vector.extract_strided_slice %165 {offsets = [0, 0], sizes = [16, 32], strides = [1, 1]} : vector<16x96xf32> to vector<16x32xf32>
    %167 = vector.extract_strided_slice %166 {offsets = [0, 0], sizes = [16, 16], strides = [1, 1]} : vector<16x32xf32> to vector<16x16xf32>
    %168 = vector.shape_cast %167 : vector<16x16xf32> to vector<2x8x16xf32>
    %169 = vector.extract_strided_slice %166 {offsets = [0, 16], sizes = [16, 16], strides = [1, 1]} : vector<16x32xf32> to vector<16x16xf32>
    %170 = vector.shape_cast %169 : vector<16x16xf32> to vector<2x8x16xf32>
    %171 = vector.shape_cast %168 : vector<2x8x16xf32> to vector<1x2x8x16xf32>
    %172 = vector.shape_cast %170 : vector<2x8x16xf32> to vector<1x2x8x16xf32>
    %173 = tpu.concatenate %171, %172 in 0 : vector<1x2x8x16xf32>, vector<1x2x8x16xf32> -> vector<2x2x8x16xf32>
    %174 = vector.shape_cast %173 : vector<2x2x8x16xf32> to vector<4x8x16xf32>
    %175 = vector.extract_strided_slice %165 {offsets = [0, 32], sizes = [16, 32], strides = [1, 1]} : vector<16x96xf32> to vector<16x32xf32>
    %176 = vector.extract_strided_slice %175 {offsets = [0, 0], sizes = [16, 16], strides = [1, 1]} : vector<16x32xf32> to vector<16x16xf32>
    %177 = vector.shape_cast %176 : vector<16x16xf32> to vector<2x8x16xf32>
    %178 = vector.extract_strided_slice %175 {offsets = [0, 16], sizes = [16, 16], strides = [1, 1]} : vector<16x32xf32> to vector<16x16xf32>
    %179 = vector.shape_cast %178 : vector<16x16xf32> to vector<2x8x16xf32>
    %180 = vector.shape_cast %177 : vector<2x8x16xf32> to vector<1x2x8x16xf32>
    %181 = vector.shape_cast %179 : vector<2x8x16xf32> to vector<1x2x8x16xf32>
    %182 = tpu.concatenate %180, %181 in 0 : vector<1x2x8x16xf32>, vector<1x2x8x16xf32> -> vector<2x2x8x16xf32>
    %183 = vector.shape_cast %182 : vector<2x2x8x16xf32> to vector<4x8x16xf32>
    %184 = vector.extract_strided_slice %165 {offsets = [0, 64], sizes = [16, 32], strides = [1, 1]} : vector<16x96xf32> to vector<16x32xf32>
    %185 = vector.extract_strided_slice %184 {offsets = [0, 0], sizes = [16, 16], strides = [1, 1]} : vector<16x32xf32> to vector<16x16xf32>
    %186 = vector.shape_cast %185 : vector<16x16xf32> to vector<2x8x16xf32>
    %187 = vector.extract_strided_slice %184 {offsets = [0, 16], sizes = [16, 16], strides = [1, 1]} : vector<16x32xf32> to vector<16x16xf32>
    %188 = vector.shape_cast %187 : vector<16x16xf32> to vector<2x8x16xf32>
    %189 = vector.shape_cast %186 : vector<2x8x16xf32> to vector<1x2x8x16xf32>
    %190 = vector.shape_cast %188 : vector<2x8x16xf32> to vector<1x2x8x16xf32>
    %191 = tpu.concatenate %189, %190 in 0 : vector<1x2x8x16xf32>, vector<1x2x8x16xf32> -> vector<2x2x8x16xf32>
    %192 = vector.shape_cast %191 : vector<2x2x8x16xf32> to vector<4x8x16xf32>
    %193 = arith.truncf %174 : vector<4x8x16xf32> to vector<4x8x16xbf16>
    %194 = arith.truncf %183 : vector<4x8x16xf32> to vector<4x8x16xbf16>
    "tpu.trace_start"() <{level = 10 : i32, message = "bqd,bkd->bqk"}> : () -> ()
    %cst_48 = arith.constant dense<0.000000e+00> : vector<4x8x8xf32>
    %195 = tpu.matmul %193, %194, %cst_48 {dimension_numbers = #tpu.dot_dimension_numbers<[2], [2], [1], [1], [0, 0, 0, 1, 1, 1], [0], [0]>} : vector<4x8x16xbf16>, vector<4x8x16xbf16>, vector<4x8x8xf32> -> vector<4x8x8xf32>
    "tpu.trace_stop"() : () -> ()
    %cst_49 = arith.constant 2.500000e-01 : f32
    %196 = vector.broadcast %cst_49 : f32 to vector<4x8x8xf32>
    %197 = arith.mulf %195, %196 : vector<4x8x8xf32>
    %198 = vector.broadcast %2 : vector<4x1x8xf32> to vector<4x8x8xf32>
    %199 = arith.addf %197, %198 : vector<4x8x8xf32>
    %cst_50 = arith.constant dense<0xFF800000> : vector<4x8xf32>
    %200 = vector.multi_reduction <maximumf>, %199, %cst_50 [2] : vector<4x8x8xf32> to vector<4x8xf32>
    %201 = vector.shape_cast %200 : vector<4x8xf32> to vector<4x8x1xf32>
    %202 = vector.broadcast %201 : vector<4x8x1xf32> to vector<4x8x8xf32>
    %203 = arith.subf %199, %202 : vector<4x8x8xf32>
    %204 = math.exp %203 : vector<4x8x8xf32>
    %cst_51 = arith.constant dense<0.000000e+00> : vector<4x8xf32>
    %205 = vector.multi_reduction <add>, %204, %cst_51 [2] : vector<4x8x8xf32> to vector<4x8xf32>
    %206 = vector.shape_cast %205 : vector<4x8xf32> to vector<4x8x1xf32>
    %207 = tpu.reciprocal %206 {approx = true} : vector<4x8x1xf32> -> vector<4x8x1xf32>
    %208 = vector.broadcast %207 : vector<4x8x1xf32> to vector<4x8x8xf32>
    %209 = arith.mulf %204, %208 : vector<4x8x8xf32>
    %210 = arith.truncf %209 : vector<4x8x8xf32> to vector<4x8x8xbf16>
    %211 = arith.truncf %192 : vector<4x8x16xf32> to vector<4x8x16xbf16>
    "tpu.trace_start"() <{level = 10 : i32, message = "bqk,bkd->bqd"}> : () -> ()
    %cst_52 = arith.constant dense<0.000000e+00> : vector<4x8x16xf32>
    %212 = tpu.matmul %210, %211, %cst_52 {dimension_numbers = #tpu.dot_dimension_numbers<[2], [1], [1], [2], [0, 0, 0, 1, 1, 2], [0], [0]>} : vector<4x8x8xbf16>, vector<4x8x16xbf16>, vector<4x8x16xf32> -> vector<4x8x16xf32>
    "tpu.trace_stop"() : () -> ()
    %213 = vector.shape_cast %212 : vector<4x8x16xf32> to vector<2x2x8x16xf32>
    %214 = vector.extract_strided_slice %213 {offsets = [0, 0, 0, 0], sizes = [1, 2, 8, 16], strides = [1, 1, 1, 1]} : vector<2x2x8x16xf32> to vector<1x2x8x16xf32>
    %215 = vector.shape_cast %214 : vector<1x2x8x16xf32> to vector<2x8x16xf32>
    %216 = vector.extract_strided_slice %213 {offsets = [1, 0, 0, 0], sizes = [1, 2, 8, 16], strides = [1, 1, 1, 1]} : vector<2x2x8x16xf32> to vector<1x2x8x16xf32>
    %217 = vector.shape_cast %216 : vector<1x2x8x16xf32> to vector<2x8x16xf32>
    %218 = tpu.concatenate %215, %217 in 2 : vector<2x8x16xf32>, vector<2x8x16xf32> -> vector<2x8x32xf32>
    %219 = vector.shape_cast %218 : vector<2x8x32xf32> to vector<16x32xf32>
    %220 = arith.truncf %219 : vector<16x32xf32> to vector<16x32xbf16>
    %c1_53 = arith.constant 1 : index
    %c0_54 = arith.constant 0 : index
    %c0_55 = arith.constant 0 : index
    %221 = vector.load %arg3[%c1_53, %c0_54, %c0_55] : memref<2x32x32xbf16, #tpu.memory_space<vmem>>, vector<1x32x32xbf16>
    %222 = vector.shape_cast %221 : vector<1x32x32xbf16> to vector<32x32xbf16>
    %cst_56 = arith.constant dense<0.000000e+00> : vector<16x32xf32>
    %223 = tpu.matmul %220, %222, %cst_56 {dimension_numbers = #tpu.dot_dimension_numbers<[1], [0], [0], [1], [0, 0, 1, 1], [], []>} : vector<16x32xbf16>, vector<32x32xbf16>, vector<16x32xf32> -> vector<16x32xf32>
    %224 = vector.broadcast %153 : vector<1x32xf32> to vector<16x32xf32>
    %225 = arith.addf %223, %224 : vector<16x32xf32>
    %226 = arith.addf %149, %225 : vector<16x32xf32>
    %cst_57 = arith.constant dense<0.000000e+00> : vector<16xf32>
    %227 = vector.multi_reduction <add>, %226, %cst_57 [1] : vector<16x32xf32> to vector<16xf32>
    %228 = vector.shape_cast %227 : vector<16xf32> to vector<16x1xf32>
    %cst_58 = arith.constant 3.200000e+01 : f32
    %229 = vector.broadcast %cst_58 : f32 to vector<16x1xf32>
    %230 = arith.divf %228, %229 : vector<16x1xf32>
    %231 = vector.broadcast %230 : vector<16x1xf32> to vector<16x32xf32>
    %232 = arith.subf %226, %231 : vector<16x32xf32>
    %233 = arith.mulf %232, %232 : vector<16x32xf32>
    %cst_59 = arith.constant dense<0.000000e+00> : vector<16xf32>
    %234 = vector.multi_reduction <add>, %233, %cst_59 [1] : vector<16x32xf32> to vector<16xf32>
    %235 = vector.shape_cast %234 : vector<16xf32> to vector<16x1xf32>
    %cst_60 = arith.constant 3.200000e+01 : f32
    %236 = vector.broadcast %cst_60 : f32 to vector<16x1xf32>
    %237 = arith.divf %235, %236 : vector<16x1xf32>
    %238 = vector.broadcast %230 : vector<16x1xf32> to vector<16x32xf32>
    %239 = arith.subf %226, %238 : vector<16x32xf32>
    %cst_61 = arith.constant 9.99999996E-13 : f32
    %240 = vector.broadcast %cst_61 : f32 to vector<16x1xf32>
    %241 = arith.addf %237, %240 : vector<16x1xf32>
    %242 = math.rsqrt %241 : vector<16x1xf32>
    %243 = vector.broadcast %242 : vector<16x1xf32> to vector<16x32xf32>
    %244 = arith.mulf %239, %243 : vector<16x32xf32>
    %245 = vector.broadcast %154 : vector<1x32xf32> to vector<16x32xf32>
    %246 = arith.mulf %244, %245 : vector<16x32xf32>
    %247 = vector.broadcast %155 : vector<1x32xf32> to vector<16x32xf32>
    %248 = arith.addf %246, %247 : vector<16x32xf32>
    %249 = arith.truncf %248 : vector<16x32xf32> to vector<16x32xbf16>
    %c1_62 = arith.constant 1 : index
    %c0_63 = arith.constant 0 : index
    %c0_64 = arith.constant 0 : index
    %250 = vector.load %arg4[%c1_62, %c0_63, %c0_64] : memref<2x32x64xbf16, #tpu.memory_space<vmem>>, vector<1x32x64xbf16>
    %251 = vector.shape_cast %250 : vector<1x32x64xbf16> to vector<32x64xbf16>
    %cst_65 = arith.constant dense<0.000000e+00> : vector<16x64xf32>
    %252 = tpu.matmul %249, %251, %cst_65 {dimension_numbers = #tpu.dot_dimension_numbers<[1], [0], [0], [1], [0, 0, 1, 1], [], []>} : vector<16x32xbf16>, vector<32x64xbf16>, vector<16x64xf32> -> vector<16x64xf32>
    %253 = vector.broadcast %156 : vector<1x64xf32> to vector<16x64xf32>
    %254 = arith.addf %252, %253 : vector<16x64xf32>
    %255 = arith.mulf %254, %254 : vector<16x64xf32>
    %256 = arith.mulf %254, %255 : vector<16x64xf32>
    %cst_66 = arith.constant 4.471500e-02 : f32
    %257 = vector.broadcast %cst_66 : f32 to vector<16x64xf32>
    %258 = arith.mulf %257, %256 : vector<16x64xf32>
    %259 = arith.addf %254, %258 : vector<16x64xf32>
    %cst_67 = arith.constant 0.797884583 : f32
    %260 = vector.broadcast %cst_67 : f32 to vector<16x64xf32>
    %261 = arith.mulf %260, %259 : vector<16x64xf32>
    %262 = math.tanh %261 : vector<16x64xf32>
    %cst_68 = arith.constant 1.000000e+00 : f32
    %263 = vector.broadcast %cst_68 : f32 to vector<16x64xf32>
    %264 = arith.addf %263, %262 : vector<16x64xf32>
    %cst_69 = arith.constant 5.000000e-01 : f32
    %265 = vector.broadcast %cst_69 : f32 to vector<16x64xf32>
    %266 = arith.mulf %265, %264 : vector<16x64xf32>
    %267 = arith.mulf %254, %266 : vector<16x64xf32>
    %268 = arith.truncf %267 : vector<16x64xf32> to vector<16x64xbf16>
    %c1_70 = arith.constant 1 : index
    %c0_71 = arith.constant 0 : index
    %c0_72 = arith.constant 0 : index
    %269 = vector.load %arg5[%c1_70, %c0_71, %c0_72] : memref<2x64x32xbf16, #tpu.memory_space<vmem>>, vector<1x64x32xbf16>
    %270 = vector.shape_cast %269 : vector<1x64x32xbf16> to vector<64x32xbf16>
    %cst_73 = arith.constant dense<0.000000e+00> : vector<16x32xf32>
    %271 = tpu.matmul %268, %270, %cst_73 {dimension_numbers = #tpu.dot_dimension_numbers<[1], [0], [0], [1], [0, 0, 1, 1], [], []>} : vector<16x64xbf16>, vector<64x32xbf16>, vector<16x32xf32> -> vector<16x32xf32>
    %272 = vector.broadcast %157 : vector<1x32xf32> to vector<16x32xf32>
    %273 = arith.addf %271, %272 : vector<16x32xf32>
    %274 = arith.addf %248, %273 : vector<16x32xf32>
    %cst_74 = arith.constant dense<0.000000e+00> : vector<16xf32>
    %275 = vector.multi_reduction <add>, %274, %cst_74 [1] : vector<16x32xf32> to vector<16xf32>
    %276 = vector.shape_cast %275 : vector<16xf32> to vector<16x1xf32>
    %cst_75 = arith.constant 3.200000e+01 : f32
    %277 = vector.broadcast %cst_75 : f32 to vector<16x1xf32>
    %278 = arith.divf %276, %277 : vector<16x1xf32>
    %279 = vector.broadcast %278 : vector<16x1xf32> to vector<16x32xf32>
    %280 = arith.subf %274, %279 : vector<16x32xf32>
    %281 = arith.mulf %280, %280 : vector<16x32xf32>
    %cst_76 = arith.constant dense<0.000000e+00> : vector<16xf32>
    %282 = vector.multi_reduction <add>, %281, %cst_76 [1] : vector<16x32xf32> to vector<16xf32>
    %283 = vector.shape_cast %282 : vector<16xf32> to vector<16x1xf32>
    %cst_77 = arith.constant 3.200000e+01 : f32
    %284 = vector.broadcast %cst_77 : f32 to vector<16x1xf32>
    %285 = arith.divf %283, %284 : vector<16x1xf32>
    %286 = vector.broadcast %278 : vector<16x1xf32> to vector<16x32xf32>
    %287 = arith.subf %274, %286 : vector<16x32xf32>
    %cst_78 = arith.constant 9.99999996E-13 : f32
    %288 = vector.broadcast %cst_78 : f32 to vector<16x1xf32>
    %289 = arith.addf %285, %288 : vector<16x1xf32>
    %290 = math.rsqrt %289 : vector<16x1xf32>
    %291 = vector.broadcast %290 : vector<16x1xf32> to vector<16x32xf32>
    %292 = arith.mulf %287, %291 : vector<16x32xf32>
    %293 = vector.broadcast %158 : vector<1x32xf32> to vector<16x32xf32>
    %294 = arith.mulf %292, %293 : vector<16x32xf32>
    %295 = vector.broadcast %159 : vector<1x32xf32> to vector<16x32xf32>
    %296 = arith.addf %294, %295 : vector<16x32xf32>
    %297 = vector.extract_strided_slice %296 {offsets = [0, 0], sizes = [1, 32], strides = [1, 1]} : vector<16x32xf32> to vector<1x32xf32>
    %298 = vector.extract_strided_slice %296 {offsets = [8, 0], sizes = [1, 32], strides = [1, 1]} : vector<16x32xf32> to vector<1x32xf32>
    %299 = tpu.concatenate %297, %298 in 0 : vector<1x32xf32>, vector<1x32xf32> -> vector<2x32xf32>
    %c0_79 = arith.constant 0 : index
    %c0_80 = arith.constant 0 : index
    %300 = vector.load %arg7[%c0_79, %c0_80] : memref<32x34xbf16, #tpu.memory_space<vmem>>, vector<32x34xbf16>
    %c0_81 = arith.constant 0 : index
    %c0_82 = arith.constant 0 : index
    %301 = vector.load %arg8[%c0_81, %c0_82] : memref<1x34xf32, #tpu.memory_space<vmem>>, vector<1x34xf32>
    %302 = arith.truncf %299 : vector<2x32xf32> to vector<2x32xbf16>
    %303 = vector.extract_strided_slice %300 {offsets = [0, 0], sizes = [32, 32], strides = [1, 1]} : vector<32x34xbf16> to vector<32x32xbf16>
    %cst_83 = arith.constant dense<0.000000e+00> : vector<2x32xf32>
    %304 = tpu.matmul %302, %303, %cst_83 {dimension_numbers = #tpu.dot_dimension_numbers<[1], [0], [0], [1], [0, 0, 1, 1], [], []>} : vector<2x32xbf16>, vector<32x32xbf16>, vector<2x32xf32> -> vector<2x32xf32>
    %305 = vector.extract_strided_slice %301 {offsets = [0, 0], sizes = [1, 32], strides = [1, 1]} : vector<1x34xf32> to vector<1x32xf32>
    %306 = vector.broadcast %305 : vector<1x32xf32> to vector<2x32xf32>
    %307 = arith.addf %304, %306 : vector<2x32xf32>
    %308 = math.tanh %307 : vector<2x32xf32>
    %309 = arith.truncf %308 : vector<2x32xf32> to vector<2x32xbf16>
    %310 = vector.extract_strided_slice %300 {offsets = [0, 32], sizes = [32, 2], strides = [1, 1]} : vector<32x34xbf16> to vector<32x2xbf16>
    %cst_84 = arith.constant dense<0.000000e+00> : vector<2x2xf32>
    %311 = tpu.matmul %309, %310, %cst_84 {dimension_numbers = #tpu.dot_dimension_numbers<[1], [0], [0], [1], [0, 0, 1, 1], [], []>} : vector<2x32xbf16>, vector<32x2xbf16>, vector<2x2xf32> -> vector<2x2xf32>
    %312 = vector.extract_strided_slice %301 {offsets = [0, 32], sizes = [1, 2], strides = [1, 1]} : vector<1x34xf32> to vector<1x2xf32>
    %313 = vector.broadcast %312 : vector<1x2xf32> to vector<2x2xf32>
    %314 = arith.addf %311, %313 : vector<2x2xf32>
    %c0_85 = arith.constant 0 : index
    %c0_86 = arith.constant 0 : index
    %315 = vector.load %arg9[%c0_85, %c0_86] : memref<2x2xf32, #tpu.memory_space<vmem>>, vector<2x2xf32>
    tpu.vector_store %arg9[%c0_85, %c0_86], %314 {strides = array<i32>} : memref<2x2xf32, #tpu.memory_space<vmem>>, vector<2x2xf32>,
    return
  }
}

</mosaic_0001>

<llo_original>
// kernel: indic_bert_classifier_forward.1
$region0: #{indic_bert_classifier_forward.1}
  #allocation0 [shape = 'u32[]', space=smem, size = 0x4, offset = 0x4, fixed_abs, tag = 'smem constant byte address 0x4 - core index']
  #allocation1 [shape = 'u32[144,128]{1,0:T(1,128)}', space=vmem, size = 0x12000, scoped, tag = 'internal scratch']
  %s0 = inlined_call_operand.vmem [shape: f32[2,8,32], index: 0, kind: input, shape index: {}]
  %s1 = inlined_call_operand.vmem [shape: f32[4,1,8], index: 1, kind: input, shape index: {}]
  %s2 = inlined_call_operand.vmem [shape: bf16[2,32,96], index: 2, kind: input, shape index: {}]
  %s3 = inlined_call_operand.vmem [shape: bf16[2,32,32], index: 3, kind: input, shape index: {}]
  %s4 = inlined_call_operand.vmem [shape: bf16[2,32,64], index: 4, kind: input, shape index: {}]
  %s5 = inlined_call_operand.vmem [shape: bf16[2,64,32], index: 5, kind: input, shape index: {}]
  %s6 = inlined_call_operand.vmem [shape: f32[2,8,96], index: 6, kind: input, shape index: {}]
  %s7 = inlined_call_operand.vmem [shape: bf16[32,34], index: 7, kind: input, shape index: {}]
  %s8 = inlined_call_operand.vmem [shape: f32[1,34], index: 8, kind: input, shape index: {}]
  %s9 = inlined_call_operand.vmem [shape: f32[2,2], index: 9, kind: output, shape index: {}]
  %s10 = sld [smem:[#allocation0]]
  $region46: #{indic_bert_classifier_forward.1} parent=0
    _
  %s12 = ssub.s32 1, %s10
  %s13 = scalar_select 0, %s12, %s10
  // Predicated region
  $region2: #{indic_bert_classifier_forward.1} parent=0 // pred_check
    _
  $region3: #{indic_bert_classifier_forward.1} parent=0 // pred_check_branch
    %15 = sbr.rel (0) target = $region5
  $region4: #{indic_bert_classifier_forward.1} parent=0 // pred_region
    _
  $region5: #{indic_bert_classifier_forward.1} parent=0 // pred_fallthru
    _
  // Predicated region
  $region6: #{indic_bert_classifier_forward.1} parent=0 // pred_check
    _
  $region7: #{indic_bert_classifier_forward.1} parent=0 // pred_check_branch
    %17 = sbr.rel (0) target = $region9
  $region8: #{indic_bert_classifier_forward.1} parent=0 // pred_region
    _
  $region9: #{indic_bert_classifier_forward.1} parent=0 // pred_fallthru
    _
  // Predicated region
  $region10: #{indic_bert_classifier_forward.1} parent=0 // pred_check
    _
  $region11: #{indic_bert_classifier_forward.1} parent=0 // pred_check_branch
    %19 = sbr.rel (0) target = $region13
  $region12: #{indic_bert_classifier_forward.1} parent=0 // pred_region
    _
  $region13: #{indic_bert_classifier_forward.1} parent=0 // pred_fallthru
    _
  // Predicated region
  $region14: #{indic_bert_classifier_forward.1} parent=0 // pred_check
    _
  $region15: #{indic_bert_classifier_forward.1} parent=0 // pred_check_branch
    %21 = sbr.rel (0) target = $region17
  $region16: #{indic_bert_classifier_forward.1} parent=0 // pred_region
    _
  $region17: #{indic_bert_classifier_forward.1} parent=0 // pred_fallthru
    _
  // Predicated region
  $region18: #{indic_bert_classifier_forward.1} parent=0 // pred_check
    _
  $region19: #{indic_bert_classifier_forward.1} parent=0 // pred_check_branch
    %23 = sbr.rel (0) target = $region21
  $region20: #{indic_bert_classifier_forward.1} parent=0 // pred_region
    _
  $region21: #{indic_bert_classifier_forward.1} parent=0 // pred_fallthru
    _
  // Predicated region
  $region22: #{indic_bert_classifier_forward.1} parent=0 // pred_check
    _
  $region23: #{indic_bert_classifier_forward.1} parent=0 // pred_check_branch
    %25 = sbr.rel (0) target = $region25
  $region24: #{indic_bert_classifier_forward.1} parent=0 // pred_region
    _
  $region25: #{indic_bert_classifier_forward.1} parent=0 // pred_fallthru
    _
  // Predicated region
  $region26: #{indic_bert_classifier_forward.1} parent=0 // pred_check
    _
  $region27: #{indic_bert_classifier_forward.1} parent=0 // pred_check_branch
    %27 = sbr.rel (0) target = $region29
  $region28: #{indic_bert_classifier_forward.1} parent=0 // pred_region
    _
  $region29: #{indic_bert_classifier_forward.1} parent=0 // pred_fallthru
    _
  // Predicated region
  $region30: #{indic_bert_classifier_forward.1} parent=0 // pred_check
    _
  $region31: #{indic_bert_classifier_forward.1} parent=0 // pred_check_branch
    %29 = sbr.rel (0) target = $region33
  $region32: #{indic_bert_classifier_forward.1} parent=0 // pred_region
    _
  $region33: #{indic_bert_classifier_forward.1} parent=0 // pred_fallthru
    _
  // Predicated region
  $region34: #{indic_bert_classifier_forward.1} parent=0 // pred_check
    _
  $region35: #{indic_bert_classifier_forward.1} parent=0 // pred_check_branch
    %31 = sbr.rel (0) target = $region37
  $region36: #{indic_bert_classifier_forward.1} parent=0 // pred_region
    _
  $region37: #{indic_bert_classifier_forward.1} parent=0 // pred_fallthru
    _
  %v33 = vld [vmem:[%s0] sm:$0xff]
  %v34 = vld [vmem:[%s0 + $0x8] sm:$0xff]
  %v35 = vld [vmem:[%s1] sm:$0x1]
  %v36 = vld [vmem:[%s1 + $0x1] sm:$0x1]
  %v37 = vld [vmem:[%s1 + $0x2] sm:$0x1]
  %v38 = vld [vmem:[%s1 + $0x3] sm:$0x1]
  %v39 = vld [vmem:[%s6] sm:$0xff]
  %v40 = vpack.c.bf16 %v34, %v33
  %v41 = vld [vmem:[%s2] sm:$0xf]
  %v42 = vld [vmem:[%s2 + $0x4] sm:$0xf]
  %v43 = vld [vmem:[%s2 + $0x8] sm:$0xf]
  %v44 = vld [vmem:[%s2 + $0xc] sm:$0xf]
  %v45 = vlaneseq
  %v46 = vshrl.u32 %v45, 7
  %v47 = vsub.s32 0, %v46
  %v48 = vrot.slane %v39, %v47
  %v53 = vunpack.c.l.b16 %v41
  %v54 = vunpack.c.l.b16 %v42
  %v55 = vunpack.c.l.b16 %v43
  %v56 = vunpack.c.l.b16 %v44
  %v57 = vpack.c.b16 %v54, %v53
  %v58 = vpack.c.b16 %v56, %v55
  %vm61 = vcmask 261120
  %v63 = vsel %vm61, %v40, 0
  %65 = vmatprep.subr.bf16.mxu0 0
  %66 = vmatpush1.bf16.msra.mxu0 0
  %67 = vmatprep.subr.bf16.mxu0 0
  %68 = vmatpush1.bf16.msra.mxu0 0
  %69 = vmatprep.subr.bf16.mxu0 0
  %70 = vmatpush1.bf16.msra.mxu0 0
  %71 = vmatprep.subr.bf16.mxu0 0
  %72 = vmatpush1.bf16.msra.mxu0 0
  %73 = vmatprep.subr.bf16.mxu0 0
  %74 = vmatpush1.bf16.msra.mxu0 0
  %75 = vmatprep.subr.bf16.mxu0 0
  %76 = vmatpush1.bf16.msra.mxu0 0
  %77 = vmatprep.subr.bf16.mxu0 0
  %78 = vmatpush1.bf16.msra.mxu0 %v58
  %79 = vmatprep.subr.bf16.mxu0 0
  %80 = vmatpush1.bf16.msra.mxu0 %v57
  %81 = vmatprep.subr.bf16.mxu0 0
  %82 = vmatpush2.bf16.msra.mxu0 0
  %83 = vmatprep.subr.bf16.mxu0 0
  %84 = vmatpush2.bf16.msra.mxu0 0
  %85 = vmatprep.subr.bf16.mxu0 0
  %86 = vmatpush2.bf16.msra.mxu0 0
  %87 = vmatprep.subr.bf16.mxu0 0
  %88 = vmatpush2.bf16.msra.mxu0 0
  %89 = vmatprep.subr.bf16.mxu0 0
  %90 = vmatpush2.bf16.msra.mxu0 0
  %91 = vmatprep.subr.bf16.mxu0 0
  %92 = vmatpush2.bf16.msra.mxu0 0
  %93 = vmatprep.subr.bf16.mxu0 0
  %94 = vmatpush2.bf16.msra.mxu0 0
  %95 = vmatprep.subr.bf16.mxu0 0
  %96 = vmatpush2.bf16.msra.mxu0 0
  %97 = vmatprep.mubr.bf16.mxu0 0
  %98 = vmatmul.mubr.bf16.gmra.mxu0 %v63
  %v99 = vpop.f32.mrf.mxu0
  %v100 = vadd.f32 %v48, %v99
  %v101 = vpop.f32.mrf.mxu0
  %v102 = vpop.f32.mrf.mxu0
  %v103 = vadd.f32 %v48, %v102
  %v104 = vpop.f32.mrf.mxu0
  %105 = vdwg.mxu0
  %108 = vrot.lane.b32.xlu0 %v100, 112
  %v109 = vpop.permute.xlu0 %108
  %110 = vrot.lane.b32.xlu0 %v103, 112
  %v111 = vpop.permute.xlu0 %110
  %v114 = vpack.c.bf16 %v100, %v100
  %v115 = vpack.c.bf16 %v103, %v103
  %v116 = vpack.c.bf16 %v109, %v109
  %v117 = vpack.c.bf16 %v111, %v111
  %119 = vrot.lane.b32.xlu0 %v114, 96
  %v120 = vpop.permute.xlu0 %119
  %vm121 = vcmask 130048
  %v123 = vsel %vm121, %v114, 0
  %v126 = vsel %vm121, %v120, 0
  %128 = vmatprep.subr.bf16.mxu0 0
  %129 = vmatpush1.bf16.xpose.msra.mxu0 0
  %130 = vmatprep.subr.bf16.mxu0 0
  %131 = vmatpush1.bf16.xpose.msra.mxu0 0
  %132 = vmatprep.subr.bf16.mxu0 0
  %133 = vmatpush1.bf16.xpose.msra.mxu0 0
  %134 = vmatprep.subr.bf16.mxu0 0
  %135 = vmatpush1.bf16.xpose.msra.mxu0 0
  %136 = vmatprep.subr.bf16.mxu0 0
  %137 = vmatpush1.bf16.xpose.msra.mxu0 0
  %138 = vmatprep.subr.bf16.mxu0 0
  %139 = vmatpush1.bf16.xpose.msra.mxu0 0
  %140 = vmatprep.subr.bf16.mxu0 0
  %141 = vmatpush1.bf16.xpose.msra.mxu0 0
  %142 = vmatprep.subr.bf16.mxu0 0
  %143 = vmatpush1.bf16.xpose.msra.mxu0 %v126
  %144 = vmatprep.subr.bf16.mxu0 0
  %145 = vmatpush2.bf16.xpose.msra.mxu0 0
  %146 = vmatprep.subr.bf16.mxu0 0
  %147 = vmatpush2.bf16.xpose.msra.mxu0 0
  %148 = vmatprep.subr.bf16.mxu0 0
  %149 = vmatpush2.bf16.xpose.msra.mxu0 0
  %150 = vmatprep.subr.bf16.mxu0 0
  %151 = vmatpush2.bf16.xpose.msra.mxu0 0
  %152 = vmatprep.subr.bf16.mxu0 0
  %153 = vmatpush2.bf16.xpose.msra.mxu0 0
  %154 = vmatprep.subr.bf16.mxu0 0
  %155 = vmatpush2.bf16.xpose.msra.mxu0 0
  %156 = vmatprep.subr.bf16.mxu0 0
  %157 = vmatpush2.bf16.xpose.msra.mxu0 0
  %158 = vmatprep.subr.bf16.mxu0 0
  %159 = vmatpush2.bf16.xpose.msra.mxu0 0
  %160 = vmatprep.mubr.bf16.mxu0 0
  %161 = vmatmul.mubr.bf16.gmra.mxu0 %v123
  %v162 = vpop.f32.mrf.mxu0
  %v163 = vadd.f32 0.0, %v162
  %v164 = vpop.f32.mrf.mxu0
  %v165 = vpop.f32.mrf.mxu0
  %v166 = vpop.f32.mrf.mxu0
  %167 = vdwg.mxu0
  %169 = vrot.lane.b32.xlu0 %v115, 96
  %v170 = vpop.permute.xlu0 %169
  %v172 = vsel %vm121, %v115, 0
  %v175 = vsel %vm121, %v170, 0
  %177 = vmatprep.subr.bf16.mxu0 0
  %178 = vmatpush1.bf16.xpose.msra.mxu0 0
  %179 = vmatprep.subr.bf16.mxu0 0
  %180 = vmatpush1.bf16.xpose.msra.mxu0 0
  %181 = vmatprep.subr.bf16.mxu0 0
  %182 = vmatpush1.bf16.xpose.msra.mxu0 0
  %183 = vmatprep.subr.bf16.mxu0 0
  %184 = vmatpush1.bf16.xpose.msra.mxu0 0
  %185 = vmatprep.subr.bf16.mxu0 0
  %186 = vmatpush1.bf16.xpose.msra.mxu0 0
  %187 = vmatprep.subr.bf16.mxu0 0
  %188 = vmatpush1.bf16.xpose.msra.mxu0 0
  %189 = vmatprep.subr.bf16.mxu0 0
  %190 = vmatpush1.bf16.xpose.msra.mxu0 0
  %191 = vmatprep.subr.bf16.mxu0 0
  %192 = vmatpush1.bf16.xpose.msra.mxu0 %v175
  %193 = vmatprep.subr.bf16.mxu0 0
  %194 = vmatpush2.bf16.xpose.msra.mxu0 0
  %195 = vmatprep.subr.bf16.mxu0 0
  %196 = vmatpush2.bf16.xpose.msra.mxu0 0
  %197 = vmatprep.subr.bf16.mxu0 0
  %198 = vmatpush2.bf16.xpose.msra.mxu0 0
  %199 = vmatprep.subr.bf16.mxu0 0
  %200 = vmatpush2.bf16.xpose.msra.mxu0 0
  %201 = vmatprep.subr.bf16.mxu0 0
  %202 = vmatpush2.bf16.xpose.msra.mxu0 0
  %203 = vmatprep.subr.bf16.mxu0 0
  %204 = vmatpush2.bf16.xpose.msra.mxu0 0
  %205 = vmatprep.subr.bf16.mxu0 0
  %206 = vmatpush2.bf16.xpose.msra.mxu0 0
  %207 = vmatprep.subr.bf16.mxu0 0
  %208 = vmatpush2.bf16.xpose.msra.mxu0 0
  %209 = vmatprep.mubr.bf16.mxu0 0
  %210 = vmatmul.mubr.bf16.gmra.mxu0 %v172
  %v211 = vpop.f32.mrf.mxu0
  %v212 = vadd.f32 0.0, %v211
  %v213 = vpop.f32.mrf.mxu0
  %v214 = vpop.f32.mrf.mxu0
  %v215 = vpop.f32.mrf.mxu0
  %216 = vdwg.mxu0
  %218 = vrot.lane.b32.xlu0 %v116, 96
  %v219 = vpop.permute.xlu0 %218
  %v221 = vsel %vm121, %v116, 0
  %v224 = vsel %vm121, %v219, 0
  %226 = vmatprep.subr.bf16.mxu0 0
  %227 = vmatpush1.bf16.xpose.msra.mxu0 0
  %228 = vmatprep.subr.bf16.mxu0 0
  %229 = vmatpush1.bf16.xpose.msra.mxu0 0
  %230 = vmatprep.subr.bf16.mxu0 0
  %231 = vmatpush1.bf16.xpose.msra.mxu0 0
  %232 = vmatprep.subr.bf16.mxu0 0
  %233 = vmatpush1.bf16.xpose.msra.mxu0 0
  %234 = vmatprep.subr.bf16.mxu0 0
  %235 = vmatpush1.bf16.xpose.msra.mxu0 0
  %236 = vmatprep.subr.bf16.mxu0 0
  %237 = vmatpush1.bf16.xpose.msra.mxu0 0
  %238 = vmatprep.subr.bf16.mxu0 0
  %239 = vmatpush1.bf16.xpose.msra.mxu0 0
  %240 = vmatprep.subr.bf16.mxu0 0
  %241 = vmatpush1.bf16.xpose.msra.mxu0 %v224
  %242 = vmatprep.subr.bf16.mxu0 0
  %243 = vmatpush2.bf16.xpose.msra.mxu0 0
  %244 = vmatprep.subr.bf16.mxu0 0
  %245 = vmatpush2.bf16.xpose.msra.mxu0 0
  %246 = vmatprep.subr.bf16.mxu0 0
  %247 = vmatpush2.bf16.xpose.msra.mxu0 0
  %248 = vmatprep.subr.bf16.mxu0 0
  %249 = vmatpush2.bf16.xpose.msra.mxu0 0
  %250 = vmatprep.subr.bf16.mxu0 0
  %251 = vmatpush2.bf16.xpose.msra.mxu0 0
  %252 = vmatprep.subr.bf16.mxu0 0
  %253 = vmatpush2.bf16.xpose.msra.mxu0 0
  %254 = vmatprep.subr.bf16.mxu0 0
  %255 = vmatpush2.bf16.xpose.msra.mxu0 0
  %256 = vmatprep.subr.bf16.mxu0 0
  %257 = vmatpush2.bf16.xpose.msra.mxu0 0
  %258 = vmatprep.mubr.bf16.mxu0 0
  %259 = vmatmul.mubr.bf16.gmra.mxu0 %v221
  %v260 = vpop.f32.mrf.mxu0
  %v261 = vadd.f32 0.0, %v260
  %v262 = vpop.f32.mrf.mxu0
  %v263 = vpop.f32.mrf.mxu0
  %v264 = vpop.f32.mrf.mxu0
  %265 = vdwg.mxu0
  %267 = vrot.lane.b32.xlu0 %v117, 96
  %v268 = vpop.permute.xlu0 %267
  %v270 = vsel %vm121, %v117, 0
  %v273 = vsel %vm121, %v268, 0
  %275 = vmatprep.subr.bf16.mxu0 0
  %276 = vmatpush1.bf16.xpose.msra.mxu0 0
  %277 = vmatprep.subr.bf16.mxu0 0
  %278 = vmatpush1.bf16.xpose.msra.mxu0 0
  %279 = vmatprep.subr.bf16.mxu0 0
  %280 = vmatpush1.bf16.xpose.msra.mxu0 0
  %281 = vmatprep.subr.bf16.mxu0 0
  %282 = vmatpush1.bf16.xpose.msra.mxu0 0
  %283 = vmatprep.subr.bf16.mxu0 0
  %284 = vmatpush1.bf16.xpose.msra.mxu0 0
  %285 = vmatprep.subr.bf16.mxu0 0
  %286 = vmatpush1.bf16.xpose.msra.mxu0 0
  %287 = vmatprep.subr.bf16.mxu0 0
  %288 = vmatpush1.bf16.xpose.msra.mxu0 0
  %289 = vmatprep.subr.bf16.mxu0 0
  %290 = vmatpush1.bf16.xpose.msra.mxu0 %v273
  %291 = vmatprep.subr.bf16.mxu0 0
  %292 = vmatpush2.bf16.xpose.msra.mxu0 0
  %293 = vmatprep.subr.bf16.mxu0 0
  %294 = vmatpush2.bf16.xpose.msra.mxu0 0
  %295 = vmatprep.subr.bf16.mxu0 0
  %296 = vmatpush2.bf16.xpose.msra.mxu0 0
  %297 = vmatprep.subr.bf16.mxu0 0
  %298 = vmatpush2.bf16.xpose.msra.mxu0 0
  %299 = vmatprep.subr.bf16.mxu0 0
  %300 = vmatpush2.bf16.xpose.msra.mxu0 0
  %301 = vmatprep.subr.bf16.mxu0 0
  %302 = vmatpush2.bf16.xpose.msra.mxu0 0
  %303 = vmatprep.subr.bf16.mxu0 0
  %304 = vmatpush2.bf16.xpose.msra.mxu0 0
  %305 = vmatprep.subr.bf16.mxu0 0
  %306 = vmatpush2.bf16.xpose.msra.mxu0 0
  %307 = vmatprep.mubr.bf16.mxu0 0
  %308 = vmatmul.mubr.bf16.gmra.mxu0 %v270
  %v309 = vpop.f32.mrf.mxu0
  %v310 = vadd.f32 0.0, %v309
  %v311 = vpop.f32.mrf.mxu0
  %v312 = vpop.f32.mrf.mxu0
  %v313 = vpop.f32.mrf.mxu0
  %314 = vdwg.mxu0
  %v315 = vmul.f32 %v163, 0.25
  %v316 = vmul.f32 %v212, 0.25
  %v317 = vmul.f32 %v261, 0.25
  %v318 = vmul.f32 %v310, 0.25
  %v323 = vlaneseq
  %v324 = vshrl.u32 %v323, 7
  %v325 = vsub.s32 0, %v324
  %v326 = vrot.slane %v35, %v325
  %v327 = vlaneseq
  %v328 = vshrl.u32 %v327, 7
  %v329 = vsub.s32 0, %v328
  %v330 = vrot.slane %v36, %v329
  %v331 = vlaneseq
  %v332 = vshrl.u32 %v331, 7
  %v333 = vsub.s32 0, %v332
  %v334 = vrot.slane %v37, %v333
  %v335 = vlaneseq
  %v336 = vshrl.u32 %v335, 7
  %v337 = vsub.s32 0, %v336
  %v338 = vrot.slane %v38, %v337
  %v343 = vadd.f32 %v315, %v326
  %v344 = vadd.f32 %v316, %v330
  %v345 = vadd.f32 %v317, %v334
  %v346 = vadd.f32 %v318, %v338
  %vm347 = vcmask 64512
  %v348 = vsel %vm347, %v343, -inf
  %349 = vmax.xlane.f32.xlu0 %v348
  %v350 = vpop.xlane.xlu0 %349
  %v351 = vsel %vm347, %v344, -inf
  %352 = vmax.xlane.f32.xlu0 %v351
  %v353 = vpop.xlane.xlu0 %352
  %v354 = vsel %vm347, %v345, -inf
  %355 = vmax.xlane.f32.xlu0 %v354
  %v356 = vpop.xlane.xlu0 %355
  %v357 = vsel %vm347, %v346, -inf
  %358 = vmax.xlane.f32.xlu0 %v357
  %v359 = vpop.xlane.xlu0 %358
  %v360 = vsub.f32 %v343, %v350
  %v361 = vsub.f32 %v344, %v353
  %v362 = vsub.f32 %v345, %v356
  %v363 = vsub.f32 %v346, %v359
  %v364 = vmul.f32 %v360, 1.442695
  %v365 = vpow.pop %v364
  %v366 = vmul.f32 %v361, 1.442695
  %v367 = vpow.pop %v366
  %v368 = vmul.f32 %v362, 1.442695
  %v369 = vpow.pop %v368
  %v370 = vmul.f32 %v363, 1.442695
  %v371 = vpow.pop %v370
  %v372 = vsel %vm347, %v365, 0.0
  %373 = vadd.xlane.f32.xlu0 %v372
  %v374 = vpop.xlane.xlu0 %373
  %v375 = vsel %vm347, %v367, 0.0
  %376 = vadd.xlane.f32.xlu0 %v375
  %v377 = vpop.xlane.xlu0 %376
  %v378 = vsel %vm347, %v369, 0.0
  %379 = vadd.xlane.f32.xlu0 %v378
  %v380 = vpop.xlane.xlu0 %379
  %v381 = vsel %vm347, %v371, 0.0
  %382 = vadd.xlane.f32.xlu0 %v381
  %v383 = vpop.xlane.xlu0 %382
  %v384 = vrcp.pop %v374
  %v385 = vrcp.pop %v377
  %v386 = vrcp.pop %v380
  %v387 = vrcp.pop %v383
  %v388 = vmul.f32 %v365, %v384
  %v389 = vmul.f32 %v367, %v385
  %v390 = vmul.f32 %v369, %v386
  %v391 = vmul.f32 %v371, %v387
  %v392 = vpack.c.bf16 %v388, %v388
  %v393 = vpack.c.bf16 %v389, %v389
  %v394 = vpack.c.bf16 %v390, %v390
  %v395 = vpack.c.bf16 %v391, %v391
  %396 = vrot.lane.b32.xlu0 %v114, 64
  %v397 = vpop.permute.xlu0 %396
  %v399 = vsel %vm347, %v392, 0
  %vm401 = vcmask 1043456
  %v403 = vsel %vm401, %v397, 0
  %405 = vmatprep.subr.bf16.mxu0 0
  %406 = vmatpush1.bf16.msra.mxu0 0
  %407 = vmatprep.subr.bf16.mxu0 0
  %408 = vmatpush1.bf16.msra.mxu0 0
  %409 = vmatprep.subr.bf16.mxu0 0
  %410 = vmatpush1.bf16.msra.mxu0 0
  %411 = vmatprep.subr.bf16.mxu0 0
  %412 = vmatpush1.bf16.msra.mxu0 0
  %413 = vmatprep.subr.bf16.mxu0 0
  %414 = vmatpush1.bf16.msra.mxu0 0
  %415 = vmatprep.subr.bf16.mxu0 0
  %416 = vmatpush1.bf16.msra.mxu0 0
  %417 = vmatprep.subr.bf16.mxu0 0
  %418 = vmatpush1.bf16.msra.mxu0 0
  %419 = vmatprep.subr.bf16.mxu0 0
  %420 = vmatpush1.bf16.msra.mxu0 %v403
  %421 = vmatprep.subr.bf16.mxu0 0
  %422 = vmatpush2.bf16.msra.mxu0 0
  %423 = vmatprep.subr.bf16.mxu0 0
  %424 = vmatpush2.bf16.msra.mxu0 0
  %425 = vmatprep.subr.bf16.mxu0 0
  %426 = vmatpush2.bf16.msra.mxu0 0
  %427 = vmatprep.subr.bf16.mxu0 0
  %428 = vmatpush2.bf16.msra.mxu0 0
  %429 = vmatprep.subr.bf16.mxu0 0
  %430 = vmatpush2.bf16.msra.mxu0 0
  %431 = vmatprep.subr.bf16.mxu0 0
  %432 = vmatpush2.bf16.msra.mxu0 0
  %433 = vmatprep.subr.bf16.mxu0 0
  %434 = vmatpush2.bf16.msra.mxu0 0
  %435 = vmatprep.subr.bf16.mxu0 0
  %436 = vmatpush2.bf16.msra.mxu0 0
  %437 = vmatprep.mubr.bf16.mxu0 0
  %438 = vmatmul.mubr.bf16.gmra.mxu0 %v399
  %v439 = vpop.f32.mrf.mxu0
  %v440 = vadd.f32 0.0, %v439
  %v441 = vpop.f32.mrf.mxu0
  %v442 = vpop.f32.mrf.mxu0
  %v443 = vpop.f32.mrf.mxu0
  %444 = vdwg.mxu0
  %445 = vrot.lane.b32.xlu0 %v115, 64
  %v446 = vpop.permute.xlu0 %445
  %v448 = vsel %vm347, %v393, 0
  %v451 = vsel %vm401, %v446, 0
  %453 = vmatprep.subr.bf16.mxu0 0
  %454 = vmatpush1.bf16.msra.mxu0 0
  %455 = vmatprep.subr.bf16.mxu0 0
  %456 = vmatpush1.bf16.msra.mxu0 0
  %457 = vmatprep.subr.bf16.mxu0 0
  %458 = vmatpush1.bf16.msra.mxu0 0
  %459 = vmatprep.subr.bf16.mxu0 0
  %460 = vmatpush1.bf16.msra.mxu0 0
  %461 = vmatprep.subr.bf16.mxu0 0
  %462 = vmatpush1.bf16.msra.mxu0 0
  %463 = vmatprep.subr.bf16.mxu0 0
  %464 = vmatpush1.bf16.msra.mxu0 0
  %465 = vmatprep.subr.bf16.mxu0 0
  %466 = vmatpush1.bf16.msra.mxu0 0
  %467 = vmatprep.subr.bf16.mxu0 0
  %468 = vmatpush1.bf16.msra.mxu0 %v451
  %469 = vmatprep.subr.bf16.mxu0 0
  %470 = vmatpush2.bf16.msra.mxu0 0
  %471 = vmatprep.subr.bf16.mxu0 0
  %472 = vmatpush2.bf16.msra.mxu0 0
  %473 = vmatprep.subr.bf16.mxu0 0
  %474 = vmatpush2.bf16.msra.mxu0 0
  %475 = vmatprep.subr.bf16.mxu0 0
  %476 = vmatpush2.bf16.msra.mxu0 0
  %477 = vmatprep.subr.bf16.mxu0 0
  %478 = vmatpush2.bf16.msra.mxu0 0
  %479 = vmatprep.subr.bf16.mxu0 0
  %480 = vmatpush2.bf16.msra.mxu0 0
  %481 = vmatprep.subr.bf16.mxu0 0
  %482 = vmatpush2.bf16.msra.mxu0 0
  %483 = vmatprep.subr.bf16.mxu0 0
  %484 = vmatpush2.bf16.msra.mxu0 0
  %485 = vmatprep.mubr.bf16.mxu0 0
  %486 = vmatmul.mubr.bf16.gmra.mxu0 %v448
  %v487 = vpop.f32.mrf.mxu0
  %v488 = vadd.f32 0.0, %v487
  %v489 = vpop.f32.mrf.mxu0
  %v490 = vpop.f32.mrf.mxu0
  %v491 = vpop.f32.mrf.mxu0
  %492 = vdwg.mxu0
  %493 = vrot.lane.b32.xlu0 %v116, 64
  %v494 = vpop.permute.xlu0 %493
  %v496 = vsel %vm347, %v394, 0
  %v499 = vsel %vm401, %v494, 0
  %501 = vmatprep.subr.bf16.mxu0 0
  %502 = vmatpush1.bf16.msra.mxu0 0
  %503 = vmatprep.subr.bf16.mxu0 0
  %504 = vmatpush1.bf16.msra.mxu0 0
  %505 = vmatprep.subr.bf16.mxu0 0
  %506 = vmatpush1.bf16.msra.mxu0 0
  %507 = vmatprep.subr.bf16.mxu0 0
  %508 = vmatpush1.bf16.msra.mxu0 0
  %509 = vmatprep.subr.bf16.mxu0 0
  %510 = vmatpush1.bf16.msra.mxu0 0
  %511 = vmatprep.subr.bf16.mxu0 0
  %512 = vmatpush1.bf16.msra.mxu0 0
  %513 = vmatprep.subr.bf16.mxu0 0
  %514 = vmatpush1.bf16.msra.mxu0 0
  %515 = vmatprep.subr.bf16.mxu0 0
  %516 = vmatpush1.bf16.msra.mxu0 %v499
  %517 = vmatprep.subr.bf16.mxu0 0
  %518 = vmatpush2.bf16.msra.mxu0 0
  %519 = vmatprep.subr.bf16.mxu0 0
  %520 = vmatpush2.bf16.msra.mxu0 0
  %521 = vmatprep.subr.bf16.mxu0 0
  %522 = vmatpush2.bf16.msra.mxu0 0
  %523 = vmatprep.subr.bf16.mxu0 0
  %524 = vmatpush2.bf16.msra.mxu0 0
  %525 = vmatprep.subr.bf16.mxu0 0
  %526 = vmatpush2.bf16.msra.mxu0 0
  %527 = vmatprep.subr.bf16.mxu0 0
  %528 = vmatpush2.bf16.msra.mxu0 0
  %529 = vmatprep.subr.bf16.mxu0 0
  %530 = vmatpush2.bf16.msra.mxu0 0
  %531 = vmatprep.subr.bf16.mxu0 0
  %532 = vmatpush2.bf16.msra.mxu0 0
  %533 = vmatprep.mubr.bf16.mxu0 0
  %534 = vmatmul.mubr.bf16.gmra.mxu0 %v496
  %v535 = vpop.f32.mrf.mxu0
  %v536 = vadd.f32 0.0, %v535
  %v537 = vpop.f32.mrf.mxu0
  %v538 = vpop.f32.mrf.mxu0
  %v539 = vpop.f32.mrf.mxu0
  %540 = vdwg.mxu0
  %541 = vrot.lane.b32.xlu0 %v117, 64
  %v542 = vpop.permute.xlu0 %541
  %v544 = vsel %vm347, %v395, 0
  %v547 = vsel %vm401, %v542, 0
  %549 = vmatprep.subr.bf16.mxu0 0
  %550 = vmatpush1.bf16.msra.mxu0 0
  %551 = vmatprep.subr.bf16.mxu0 0
  %552 = vmatpush1.bf16.msra.mxu0 0
  %553 = vmatprep.subr.bf16.mxu0 0
  %554 = vmatpush1.bf16.msra.mxu0 0
  %555 = vmatprep.subr.bf16.mxu0 0
  %556 = vmatpush1.bf16.msra.mxu0 0
  %557 = vmatprep.subr.bf16.mxu0 0
  %558 = vmatpush1.bf16.msra.mxu0 0
  %559 = vmatprep.subr.bf16.mxu0 0
  %560 = vmatpush1.bf16.msra.mxu0 0
  %561 = vmatprep.subr.bf16.mxu0 0
  %562 = vmatpush1.bf16.msra.mxu0 0
  %563 = vmatprep.subr.bf16.mxu0 0
  %564 = vmatpush1.bf16.msra.mxu0 %v547
  %565 = vmatprep.subr.bf16.mxu0 0
  %566 = vmatpush2.bf16.msra.mxu0 0
  %567 = vmatprep.subr.bf16.mxu0 0
  %568 = vmatpush2.bf16.msra.mxu0 0
  %569 = vmatprep.subr.bf16.mxu0 0
  %570 = vmatpush2.bf16.msra.mxu0 0
  %571 = vmatprep.subr.bf16.mxu0 0
  %572 = vmatpush2.bf16.msra.mxu0 0
  %573 = vmatprep.subr.bf16.mxu0 0
  %574 = vmatpush2.bf16.msra.mxu0 0
  %575 = vmatprep.subr.bf16.mxu0 0
  %576 = vmatpush2.bf16.msra.mxu0 0
  %577 = vmatprep.subr.bf16.mxu0 0
  %578 = vmatpush2.bf16.msra.mxu0 0
  %579 = vmatprep.subr.bf16.mxu0 0
  %580 = vmatpush2.bf16.msra.mxu0 0
  %581 = vmatprep.mubr.bf16.mxu0 0
  %582 = vmatmul.mubr.bf16.gmra.mxu0 %v544
  %v583 = vpop.f32.mrf.mxu0
  %v584 = vadd.f32 0.0, %v583
  %v585 = vpop.f32.mrf.mxu0
  %v586 = vpop.f32.mrf.mxu0
  %v587 = vpop.f32.mrf.mxu0
  %588 = vdwg.mxu0
  %591 = vrot.lane.b32.xlu0 %v536, 16
  %v592 = vpop.permute.xlu0 %591
  %593 = vrot.lane.b32.xlu0 %v584, 16
  %v594 = vpop.permute.xlu0 %593
  %v597 = vsel %vm121, %v440, %v592
  %v598 = vsel %vm121, %v488, %v594
  %v599 = vpack.c.bf16 %v598, %v597
  %v600 = vld [vmem:[%s3] sm:$0xf]
  %v601 = vld [vmem:[%s3 + $0x4] sm:$0xf]
  %v602 = vld [vmem:[%s3 + $0x8] sm:$0xf]
  %v603 = vld [vmem:[%s3 + $0xc] sm:$0xf]
  %v604 = vlaneseq
  %v605 = vshrl.u32 %v604, 7
  %v606 = vsub.s32 1, %v605
  %v607 = vrot.slane %v39, %v606
  %v612 = vunpack.c.l.b16 %v600
  %v613 = vunpack.c.l.b16 %v601
  %v614 = vunpack.c.l.b16 %v602
  %v615 = vunpack.c.l.b16 %v603
  %v616 = vpack.c.b16 %v613, %v612
  %v617 = vpack.c.b16 %v615, %v614
  %v621 = vsel %vm61, %v599, 0
  %623 = vmatprep.subr.bf16.mxu0 0
  %624 = vmatpush1.bf16.msra.mxu0 0
  %625 = vmatprep.subr.bf16.mxu0 0
  %626 = vmatpush1.bf16.msra.mxu0 0
  %627 = vmatprep.subr.bf16.mxu0 0
  %628 = vmatpush1.bf16.msra.mxu0 0
  %629 = vmatprep.subr.bf16.mxu0 0
  %630 = vmatpush1.bf16.msra.mxu0 0
  %631 = vmatprep.subr.bf16.mxu0 0
  %632 = vmatpush1.bf16.msra.mxu0 0
  %633 = vmatprep.subr.bf16.mxu0 0
  %634 = vmatpush1.bf16.msra.mxu0 0
  %635 = vmatprep.subr.bf16.mxu0 0
  %636 = vmatpush1.bf16.msra.mxu0 %v617
  %637 = vmatprep.subr.bf16.mxu0 0
  %638 = vmatpush1.bf16.msra.mxu0 %v616
  %639 = vmatprep.subr.bf16.mxu0 0
  %640 = vmatpush2.bf16.msra.mxu0 0
  %641 = vmatprep.subr.bf16.mxu0 0
  %642 = vmatpush2.bf16.msra.mxu0 0
  %643 = vmatprep.subr.bf16.mxu0 0
  %644 = vmatpush2.bf16.msra.mxu0 0
  %645 = vmatprep.subr.bf16.mxu0 0
  %646 = vmatpush2.bf16.msra.mxu0 0
  %647 = vmatprep.subr.bf16.mxu0 0
  %648 = vmatpush2.bf16.msra.mxu0 0
  %649 = vmatprep.subr.bf16.mxu0 0
  %650 = vmatpush2.bf16.msra.mxu0 0
  %651 = vmatprep.subr.bf16.mxu0 0
  %652 = vmatpush2.bf16.msra.mxu0 0
  %653 = vmatprep.subr.bf16.mxu0 0
  %654 = vmatpush2.bf16.msra.mxu0 0
  %655 = vmatprep.mubr.bf16.mxu0 0
  %656 = vmatmul.mubr.bf16.gmra.mxu0 %v621
  %v657 = vpop.f32.mrf.mxu0
  %v658 = vadd.f32 %v607, %v657
  %v659 = vpop.f32.mrf.mxu0
  %v660 = vpop.f32.mrf.mxu0
  %v661 = vadd.f32 %v607, %v660
  %v662 = vpop.f32.mrf.mxu0
  %663 = vdwg.mxu0
  %v664 = vadd.f32 %v33, %v658
  %v665 = vadd.f32 %v34, %v661
  %v666 = vsel %vm61, %v664, 0.0
  %667 = vadd.xlane.f32.xlu0 %v666
  %v668 = vpop.xlane.xlu0 %667
  %v669 = vsel %vm61, %v665, 0.0
  %670 = vadd.xlane.f32.xlu0 %v669
  %v671 = vpop.xlane.xlu0 %670
  %v672 = vrcp.pop 32.0
  %v673 = vmul.f32 %v668, %v672
  %v674 = vmul.f32 %v671, %v672
  %v675 = vsub.f32 %v664, %v673
  %v676 = vsub.f32 %v665, %v674
  %v677 = vmul.f32 %v675, %v675
  %v678 = vmul.f32 %v676, %v676
  %v679 = vsel %vm61, %v677, 0.0
  %680 = vadd.xlane.f32.xlu0 %v679
  %v681 = vpop.xlane.xlu0 %680
  %v682 = vsel %vm61, %v678, 0.0
  %683 = vadd.xlane.f32.xlu0 %v682
  %v684 = vpop.xlane.xlu0 %683
  %v685 = vmul.f32 %v681, %v672
  %v686 = vmul.f32 %v684, %v672
  %v687 = vadd.f32 %v685, 1e-12
  %v688 = vadd.f32 %v686, 1e-12
  %v689 = vrsqrt.pop %v687
  %v690 = vrsqrt.pop %v688
  %v691 = vmul.f32 %v675, %v689
  %v692 = vmul.f32 %v676, %v690
  %v693 = vlaneseq
  %v694 = vshrl.u32 %v693, 7
  %v695 = vsub.s32 2, %v694
  %v696 = vrot.slane %v39, %v695
  %v697 = vmul.f32 %v691, %v696
  %v698 = vmul.f32 %v692, %v696
  %v699 = vlaneseq
  %v700 = vshrl.u32 %v699, 7
  %v701 = vsub.s32 3, %v700
  %v702 = vrot.slane %v39, %v701
  %v703 = vadd.f32 %v697, %v702
  %v704 = vadd.f32 %v698, %v702
  %v705 = vpack.c.bf16 %v704, %v703
  %v706 = vld [vmem:[%s4] sm:$0xf]
  %v707 = vld [vmem:[%s4 + $0x4] sm:$0xf]
  %v708 = vld [vmem:[%s4 + $0x8] sm:$0xf]
  %v709 = vld [vmem:[%s4 + $0xc] sm:$0xf]
  %v710 = vlaneseq
  %v711 = vshrl.u32 %v710, 7
  %v712 = vsub.s32 4, %v711
  %v713 = vrot.slane %v39, %v712
  %v718 = vunpack.c.l.b16 %v706
  %v719 = vunpack.c.l.b16 %v707
  %v720 = vunpack.c.l.b16 %v708
  %v721 = vunpack.c.l.b16 %v709
  %v722 = vpack.c.b16 %v719, %v718
  %v723 = vpack.c.b16 %v721, %v720
  %v727 = vsel %vm61, %v705, 0
  %729 = vmatprep.subr.bf16.mxu0 0
  %730 = vmatpush1.bf16.msra.mxu0 0
  %731 = vmatprep.subr.bf16.mxu0 0
  %732 = vmatpush1.bf16.msra.mxu0 0
  %733 = vmatprep.subr.bf16.mxu0 0
  %734 = vmatpush1.bf16.msra.mxu0 0
  %735 = vmatprep.subr.bf16.mxu0 0
  %736 = vmatpush1.bf16.msra.mxu0 0
  %737 = vmatprep.subr.bf16.mxu0 0
  %738 = vmatpush1.bf16.msra.mxu0 0
  %739 = vmatprep.subr.bf16.mxu0 0
  %740 = vmatpush1.bf16.msra.mxu0 0
  %741 = vmatprep.subr.bf16.mxu0 0
  %742 = vmatpush1.bf16.msra.mxu0 %v723
  %743 = vmatprep.subr.bf16.mxu0 0
  %744 = vmatpush1.bf16.msra.mxu0 %v722
  %745 = vmatprep.subr.bf16.mxu0 0
  %746 = vmatpush2.bf16.msra.mxu0 0
  %747 = vmatprep.subr.bf16.mxu0 0
  %748 = vmatpush2.bf16.msra.mxu0 0
  %749 = vmatprep.subr.bf16.mxu0 0
  %750 = vmatpush2.bf16.msra.mxu0 0
  %751 = vmatprep.subr.bf16.mxu0 0
  %752 = vmatpush2.bf16.msra.mxu0 0
  %753 = vmatprep.subr.bf16.mxu0 0
  %754 = vmatpush2.bf16.msra.mxu0 0
  %755 = vmatprep.subr.bf16.mxu0 0
  %756 = vmatpush2.bf16.msra.mxu0 0
  %757 = vmatprep.subr.bf16.mxu0 0
  %758 = vmatpush2.bf16.msra.mxu0 0
  %759 = vmatprep.subr.bf16.mxu0 0
  %760 = vmatpush2.bf16.msra.mxu0 0
  %761 = vmatprep.mubr.bf16.mxu0 0
  %762 = vmatmul.mubr.bf16.gmra.mxu0 %v727
  %v763 = vpop.f32.mrf.mxu0
  %v764 = vadd.f32 %v713, %v763
  %v765 = vpop.f32.mrf.mxu0
  %v766 = vpop.f32.mrf.mxu0
  %v767 = vadd.f32 %v713, %v766
  %v768 = vpop.f32.mrf.mxu0
  %769 = vdwg.mxu0
  %v770 = vmul.f32 %v764, %v764
  %v771 = vmul.f32 %v767, %v767
  %v772 = vmul.f32 %v764, %v770
  %v773 = vmul.f32 %v767, %v771
  %v774 = vmul.f32 %v772, 0.044715
  %v775 = vmul.f32 %v773, 0.044715
  %v776 = vadd.f32 %v764, %v774
  %v777 = vadd.f32 %v767, %v775
  %v778 = vmul.f32 %v776, 0.7978846
  %v779 = vmul.f32 %v777, 0.7978846
  %v780 = vtanh.pop %v778
  %v781 = vtanh.pop %v779
  %v782 = vadd.f32 %v780, 1.0
  %v783 = vadd.f32 %v781, 1.0
  %v784 = vmul.f32 %v782, 0.5
  %v785 = vmul.f32 %v783, 0.5
  %v786 = vmul.f32 %v764, %v784
  %v787 = vmul.f32 %v767, %v785
  %v788 = vpack.c.bf16 %v787, %v786
  %v789 = vld [vmem:[%s5] sm:$0xf]
  %v790 = vld [vmem:[%s5 + $0x4] sm:$0xf]
  %v791 = vld [vmem:[%s5 + $0x8] sm:$0xf]
  %v792 = vld [vmem:[%s5 + $0xc] sm:$0xf]
  %v793 = vld [vmem:[%s5 + $0x10] sm:$0xf]
  %v794 = vld [vmem:[%s5 + $0x14] sm:$0xf]
  %v795 = vld [vmem:[%s5 + $0x18] sm:$0xf]
  %v796 = vld [vmem:[%s5 + $0x1c] sm:$0xf]
  %v797 = vlaneseq
  %v798 = vshrl.u32 %v797, 7
  %v799 = vsub.s32 5, %v798
  %v800 = vrot.slane %v39, %v799
  %v809 = vunpack.c.l.b16 %v789
  %v810 = vunpack.c.l.b16 %v790
  %v811 = vunpack.c.l.b16 %v791
  %v812 = vunpack.c.l.b16 %v792
  %v813 = vunpack.c.l.b16 %v793
  %v814 = vunpack.c.l.b16 %v794
  %v815 = vunpack.c.l.b16 %v795
  %v816 = vunpack.c.l.b16 %v796
  %v817 = vpack.c.b16 %v810, %v809
  %v818 = vpack.c.b16 %v812, %v811
  %v819 = vpack.c.b16 %v814, %v813
  %v820 = vpack.c.b16 %v816, %v815
  %vm825 = vcmask 523264
  %v827 = vsel %vm825, %v788, 0
  %829 = vmatprep.subr.bf16.mxu0 0
  %830 = vmatpush1.bf16.msra.mxu0 0
  %831 = vmatprep.subr.bf16.mxu0 0
  %832 = vmatpush1.bf16.msra.mxu0 0
  %833 = vmatprep.subr.bf16.mxu0 0
  %834 = vmatpush1.bf16.msra.mxu0 0
  %835 = vmatprep.subr.bf16.mxu0 0
  %836 = vmatpush1.bf16.msra.mxu0 0
  %837 = vmatprep.subr.bf16.mxu0 0
  %838 = vmatpush1.bf16.msra.mxu0 %v820
  %839 = vmatprep.subr.bf16.mxu0 0
  %840 = vmatpush1.bf16.msra.mxu0 %v819
  %841 = vmatprep.subr.bf16.mxu0 0
  %842 = vmatpush1.bf16.msra.mxu0 %v818
  %843 = vmatprep.subr.bf16.mxu0 0
  %844 = vmatpush1.bf16.msra.mxu0 %v817
  %845 = vmatprep.subr.bf16.mxu0 0
  %846 = vmatpush2.bf16.msra.mxu0 0
  %847 = vmatprep.subr.bf16.mxu0 0
  %848 = vmatpush2.bf16.msra.mxu0 0
  %849 = vmatprep.subr.bf16.mxu0 0
  %850 = vmatpush2.bf16.msra.mxu0 0
  %851 = vmatprep.subr.bf16.mxu0 0
  %852 = vmatpush2.bf16.msra.mxu0 0
  %853 = vmatprep.subr.bf16.mxu0 0
  %854 = vmatpush2.bf16.msra.mxu0 0
  %855 = vmatprep.subr.bf16.mxu0 0
  %856 = vmatpush2.bf16.msra.mxu0 0
  %857 = vmatprep.subr.bf16.mxu0 0
  %858 = vmatpush2.bf16.msra.mxu0 0
  %859 = vmatprep.subr.bf16.mxu0 0
  %860 = vmatpush2.bf16.msra.mxu0 0
  %861 = vmatprep.mubr.bf16.mxu0 0
  %862 = vmatmul.mubr.bf16.gmra.mxu0 %v827
  %v863 = vpop.f32.mrf.mxu0
  %v864 = vadd.f32 %v800, %v863
  %v865 = vpop.f32.mrf.mxu0
  %v866 = vpop.f32.mrf.mxu0
  %v867 = vadd.f32 %v800, %v866
  %v868 = vpop.f32.mrf.mxu0
  %869 = vdwg.mxu0
  %v870 = vadd.f32 %v703, %v864
  %v871 = vadd.f32 %v704, %v867
  %v872 = vsel %vm61, %v870, 0.0
  %873 = vadd.xlane.f32.xlu0 %v872
  %v874 = vpop.xlane.xlu0 %873
  %v875 = vsel %vm61, %v871, 0.0
  %876 = vadd.xlane.f32.xlu0 %v875
  %v877 = vpop.xlane.xlu0 %876
  %v878 = vmul.f32 %v874, %v672
  %v879 = vmul.f32 %v877, %v672
  %v880 = vsub.f32 %v870, %v878
  %v881 = vsub.f32 %v871, %v879
  %v882 = vmul.f32 %v880, %v880
  %v883 = vmul.f32 %v881, %v881
  %v884 = vsel %vm61, %v882, 0.0
  %885 = vadd.xlane.f32.xlu0 %v884
  %v886 = vpop.xlane.xlu0 %885
  %v887 = vsel %vm61, %v883, 0.0
  %888 = vadd.xlane.f32.xlu0 %v887
  %v889 = vpop.xlane.xlu0 %888
  %v890 = vmul.f32 %v886, %v672
  %v891 = vmul.f32 %v889, %v672
  %v892 = vadd.f32 %v890, 1e-12
  %v893 = vadd.f32 %v891, 1e-12
  %v894 = vrsqrt.pop %v892
  %v895 = vrsqrt.pop %v893
  %v896 = vmul.f32 %v880, %v894
  %v897 = vmul.f32 %v881, %v895
  %v898 = vlaneseq
  %v899 = vshrl.u32 %v898, 7
  %v900 = vsub.s32 6, %v899
  %v901 = vrot.slane %v39, %v900
  %v902 = vmul.f32 %v896, %v901
  %v903 = vmul.f32 %v897, %v901
  %v904 = vlaneseq
  %v905 = vshrl.u32 %v904, 7
  %v906 = vsub.s32 7, %v905
  %v907 = vrot.slane %v39, %v906
  %v908 = vadd.f32 %v902, %v907
  %v909 = vadd.f32 %v903, %v907
  %s910 = scalar_lea.vmem %s6, 8
  %v911 = vld [vmem:[%s910] sm:$0xff]
  %v912 = vpack.c.bf16 %v909, %v908
  %s913 = scalar_lea.vmem %s2, 16
  %v914 = vld [vmem:[%s913] sm:$0xf]
  %v915 = vld [vmem:[%s913 + $0x4] sm:$0xf]
  %v916 = vld [vmem:[%s913 + $0x8] sm:$0xf]
  %v917 = vld [vmem:[%s913 + $0xc] sm:$0xf]
  %v918 = vlaneseq
  %v919 = vshrl.u32 %v918, 7
  %v920 = vsub.s32 0, %v919
  %v921 = vrot.slane %v911, %v920
  %v926 = vunpack.c.l.b16 %v914
  %v927 = vunpack.c.l.b16 %v915
  %v928 = vunpack.c.l.b16 %v916
  %v929 = vunpack.c.l.b16 %v917
  %v930 = vpack.c.b16 %v927, %v926
  %v931 = vpack.c.b16 %v929, %v928
  %v935 = vsel %vm61, %v912, 0
  %937 = vmatprep.subr.bf16.mxu0 0
  %938 = vmatpush1.bf16.msra.mxu0 0
  %939 = vmatprep.subr.bf16.mxu0 0
  %940 = vmatpush1.bf16.msra.mxu0 0
  %941 = vmatprep.subr.bf16.mxu0 0
  %942 = vmatpush1.bf16.msra.mxu0 0
  %943 = vmatprep.subr.bf16.mxu0 0
  %944 = vmatpush1.bf16.msra.mxu0 0
  %945 = vmatprep.subr.bf16.mxu0 0
  %946 = vmatpush1.bf16.msra.mxu0 0
  %947 = vmatprep.subr.bf16.mxu0 0
  %948 = vmatpush1.bf16.msra.mxu0 0
  %949 = vmatprep.subr.bf16.mxu0 0
  %950 = vmatpush1.bf16.msra.mxu0 %v931
  %951 = vmatprep.subr.bf16.mxu0 0
  %952 = vmatpush1.bf16.msra.mxu0 %v930
  %953 = vmatprep.subr.bf16.mxu0 0
  %954 = vmatpush2.bf16.msra.mxu0 0
  %955 = vmatprep.subr.bf16.mxu0 0
  %956 = vmatpush2.bf16.msra.mxu0 0
  %957 = vmatprep.subr.bf16.mxu0 0
  %958 = vmatpush2.bf16.msra.mxu0 0
  %959 = vmatprep.subr.bf16.mxu0 0
  %960 = vmatpush2.bf16.msra.mxu0 0
  %961 = vmatprep.subr.bf16.mxu0 0
  %962 = vmatpush2.bf16.msra.mxu0 0
  %963 = vmatprep.subr.bf16.mxu0 0
  %964 = vmatpush2.bf16.msra.mxu0 0
  %965 = vmatprep.subr.bf16.mxu0 0
  %966 = vmatpush2.bf16.msra.mxu0 0
  %967 = vmatprep.subr.bf16.mxu0 0
  %968 = vmatpush2.bf16.msra.mxu0 0
  %969 = vmatprep.mubr.bf16.mxu0 0
  %970 = vmatmul.mubr.bf16.gmra.mxu0 %v935
  %v971 = vpop.f32.mrf.mxu0
  %v972 = vadd.f32 %v921, %v971
  %v973 = vpop.f32.mrf.mxu0
  %v974 = vpop.f32.mrf.mxu0
  %v975 = vadd.f32 %v921, %v974
  %v976 = vpop.f32.mrf.mxu0
  %977 = vdwg.mxu0
  %980 = vrot.lane.b32.xlu0 %v972, 112
  %v981 = vpop.permute.xlu0 %980
  %982 = vrot.lane.b32.xlu0 %v975, 112
  %v983 = vpop.permute.xlu0 %982
  %v986 = vpack.c.bf16 %v972, %v972
  %v987 = vpack.c.bf16 %v975, %v975
  %v988 = vpack.c.bf16 %v981, %v981
  %v989 = vpack.c.bf16 %v983, %v983
  %991 = vrot.lane.b32.xlu0 %v986, 96
  %v992 = vpop.permute.xlu0 %991
  %v994 = vsel %vm121, %v986, 0
  %v997 = vsel %vm121, %v992, 0
  %999 = vmatprep.subr.bf16.mxu0 0
  %1000 = vmatpush1.bf16.xpose.msra.mxu0 0
  %1001 = vmatprep.subr.bf16.mxu0 0
  %1002 = vmatpush1.bf16.xpose.msra.mxu0 0
  %1003 = vmatprep.subr.bf16.mxu0 0
  %1004 = vmatpush1.bf16.xpose.msra.mxu0 0
  %1005 = vmatprep.subr.bf16.mxu0 0
  %1006 = vmatpush1.bf16.xpose.msra.mxu0 0
  %1007 = vmatprep.subr.bf16.mxu0 0
  %1008 = vmatpush1.bf16.xpose.msra.mxu0 0
  %1009 = vmatprep.subr.bf16.mxu0 0
  %1010 = vmatpush1.bf16.xpose.msra.mxu0 0
  %1011 = vmatprep.subr.bf16.mxu0 0
  %1012 = vmatpush1.bf16.xpose.msra.mxu0 0
  %1013 = vmatprep.subr.bf16.mxu0 0
  %1014 = vmatpush1.bf16.xpose.msra.mxu0 %v997
  %1015 = vmatprep.subr.bf16.mxu0 0
  %1016 = vmatpush2.bf16.xpose.msra.mxu0 0
  %1017 = vmatprep.subr.bf16.mxu0 0
  %1018 = vmatpush2.bf16.xpose.msra.mxu0 0
  %1019 = vmatprep.subr.bf16.mxu0 0
  %1020 = vmatpush2.bf16.xpose.msra.mxu0 0
  %1021 = vmatprep.subr.bf16.mxu0 0
  %1022 = vmatpush2.bf16.xpose.msra.mxu0 0
  %1023 = vmatprep.subr.bf16.mxu0 0
  %1024 = vmatpush2.bf16.xpose.msra.mxu0 0
  %1025 = vmatprep.subr.bf16.mxu0 0
  %1026 = vmatpush2.bf16.xpose.msra.mxu0 0
  %1027 = vmatprep.subr.bf16.mxu0 0
  %1028 = vmatpush2.bf16.xpose.msra.mxu0 0
  %1029 = vmatprep.subr.bf16.mxu0 0
  %1030 = vmatpush2.bf16.xpose.msra.mxu0 0
  %1031 = vmatprep.mubr.bf16.mxu0 0
  %1032 = vmatmul.mubr.bf16.gmra.mxu0 %v994
  %v1033 = vpop.f32.mrf.mxu0
  %v1034 = vadd.f32 0.0, %v1033
  %v1035 = vpop.f32.mrf.mxu0
  %v1036 = vpop.f32.mrf.mxu0
  %v1037 = vpop.f32.mrf.mxu0
  %1038 = vdwg.mxu0
  %1040 = vrot.lane.b32.xlu0 %v987, 96
  %v1041 = vpop.permute.xlu0 %1040
  %v1043 = vsel %vm121, %v987, 0
  %v1046 = vsel %vm121, %v1041, 0
  %1048 = vmatprep.subr.bf16.mxu0 0
  %1049 = vmatpush1.bf16.xpose.msra.mxu0 0
  %1050 = vmatprep.subr.bf16.mxu0 0
  %1051 = vmatpush1.bf16.xpose.msra.mxu0 0
  %1052 = vmatprep.subr.bf16.mxu0 0
  %1053 = vmatpush1.bf16.xpose.msra.mxu0 0
  %1054 = vmatprep.subr.bf16.mxu0 0
  %1055 = vmatpush1.bf16.xpose.msra.mxu0 0
  %1056 = vmatprep.subr.bf16.mxu0 0
  %1057 = vmatpush1.bf16.xpose.msra.mxu0 0
  %1058 = vmatprep.subr.bf16.mxu0 0
  %1059 = vmatpush1.bf16.xpose.msra.mxu0 0
  %1060 = vmatprep.subr.bf16.mxu0 0
  %1061 = vmatpush1.bf16.xpose.msra.mxu0 0
  %1062 = vmatprep.subr.bf16.mxu0 0
  %1063 = vmatpush1.bf16.xpose.msra.mxu0 %v1046
  %1064 = vmatprep.subr.bf16.mxu0 0
  %1065 = vmatpush2.bf16.xpose.msra.mxu0 0
  %1066 = vmatprep.subr.bf16.mxu0 0
  %1067 = vmatpush2.bf16.xpose.msra.mxu0 0
  %1068 = vmatprep.subr.bf16.mxu0 0
  %1069 = vmatpush2.bf16.xpose.msra.mxu0 0
  %1070 = vmatprep.subr.bf16.mxu0 0
  %1071 = vmatpush2.bf16.xpose.msra.mxu0 0
  %1072 = vmatprep.subr.bf16.mxu0 0
  %1073 = vmatpush2.bf16.xpose.msra.mxu0 0
  %1074 = vmatprep.subr.bf16.mxu0 0
  %1075 = vmatpush2.bf16.xpose.msra.mxu0 0
  %1076 = vmatprep.subr.bf16.mxu0 0
  %1077 = vmatpush2.bf16.xpose.msra.mxu0 0
  %1078 = vmatprep.subr.bf16.mxu0 0
  %1079 = vmatpush2.bf16.xpose.msra.mxu0 0
  %1080 = vmatprep.mubr.bf16.mxu0 0
  %1081 = vmatmul.mubr.bf16.gmra.mxu0 %v1043
  %v1082 = vpop.f32.mrf.mxu0
  %v1083 = vadd.f32 0.0, %v1082
  %v1084 = vpop.f32.mrf.mxu0
  %v1085 = vpop.f32.mrf.mxu0
  %v1086 = vpop.f32.mrf.mxu0
  %1087 = vdwg.mxu0
  %1089 = vrot.lane.b32.xlu0 %v988, 96
  %v1090 = vpop.permute.xlu0 %1089
  %v1092 = vsel %vm121, %v988, 0
  %v1095 = vsel %vm121, %v1090, 0
  %1097 = vmatprep.subr.bf16.mxu0 0
  %1098 = vmatpush1.bf16.xpose.msra.mxu0 0
  %1099 = vmatprep.subr.bf16.mxu0 0
  %1100 = vmatpush1.bf16.xpose.msra.mxu0 0
  %1101 = vmatprep.subr.bf16.mxu0 0
  %1102 = vmatpush1.bf16.xpose.msra.mxu0 0
  %1103 = vmatprep.subr.bf16.mxu0 0
  %1104 = vmatpush1.bf16.xpose.msra.mxu0 0
  %1105 = vmatprep.subr.bf16.mxu0 0
  %1106 = vmatpush1.bf16.xpose.msra.mxu0 0
  %1107 = vmatprep.subr.bf16.mxu0 0
  %1108 = vmatpush1.bf16.xpose.msra.mxu0 0
  %1109 = vmatprep.subr.bf16.mxu0 0
  %1110 = vmatpush1.bf16.xpose.msra.mxu0 0
  %1111 = vmatprep.subr.bf16.mxu0 0
  %1112 = vmatpush1.bf16.xpose.msra.mxu0 %v1095
  %1113 = vmatprep.subr.bf16.mxu0 0
  %1114 = vmatpush2.bf16.xpose.msra.mxu0 0
  %1115 = vmatprep.subr.bf16.mxu0 0
  %1116 = vmatpush2.bf16.xpose.msra.mxu0 0
  %1117 = vmatprep.subr.bf16.mxu0 0
  %1118 = vmatpush2.bf16.xpose.msra.mxu0 0
  %1119 = vmatprep.subr.bf16.mxu0 0
  %1120 = vmatpush2.bf16.xpose.msra.mxu0 0
  %1121 = vmatprep.subr.bf16.mxu0 0
  %1122 = vmatpush2.bf16.xpose.msra.mxu0 0
  %1123 = vmatprep.subr.bf16.mxu0 0
  %1124 = vmatpush2.bf16.xpose.msra.mxu0 0
  %1125 = vmatprep.subr.bf16.mxu0 0
  %1126 = vmatpush2.bf16.xpose.msra.mxu0 0
  %1127 = vmatprep.subr.bf16.mxu0 0
  %1128 = vmatpush2.bf16.xpose.msra.mxu0 0
  %1129 = vmatprep.mubr.bf16.mxu0 0
  %1130 = vmatmul.mubr.bf16.gmra.mxu0 %v1092
  %v1131 = vpop.f32.mrf.mxu0
  %v1132 = vadd.f32 0.0, %v1131
  %v1133 = vpop.f32.mrf.mxu0
  %v1134 = vpop.f32.mrf.mxu0
  %v1135 = vpop.f32.mrf.mxu0
  %1136 = vdwg.mxu0
  %1138 = vrot.lane.b32.xlu0 %v989, 96
  %v1139 = vpop.permute.xlu0 %1138
  %v1141 = vsel %vm121, %v989, 0
  %v1144 = vsel %vm121, %v1139, 0
  %1146 = vmatprep.subr.bf16.mxu0 0
  %1147 = vmatpush1.bf16.xpose.msra.mxu0 0
  %1148 = vmatprep.subr.bf16.mxu0 0
  %1149 = vmatpush1.bf16.xpose.msra.mxu0 0
  %1150 = vmatprep.subr.bf16.mxu0 0
  %1151 = vmatpush1.bf16.xpose.msra.mxu0 0
  %1152 = vmatprep.subr.bf16.mxu0 0
  %1153 = vmatpush1.bf16.xpose.msra.mxu0 0
  %1154 = vmatprep.subr.bf16.mxu0 0
  %1155 = vmatpush1.bf16.xpose.msra.mxu0 0
  %1156 = vmatprep.subr.bf16.mxu0 0
  %1157 = vmatpush1.bf16.xpose.msra.mxu0 0
  %1158 = vmatprep.subr.bf16.mxu0 0
  %1159 = vmatpush1.bf16.xpose.msra.mxu0 0
  %1160 = vmatprep.subr.bf16.mxu0 0
  %1161 = vmatpush1.bf16.xpose.msra.mxu0 %v1144
  %1162 = vmatprep.subr.bf16.mxu0 0
  %1163 = vmatpush2.bf16.xpose.msra.mxu0 0
  %1164 = vmatprep.subr.bf16.mxu0 0
  %1165 = vmatpush2.bf16.xpose.msra.mxu0 0
  %1166 = vmatprep.subr.bf16.mxu0 0
  %1167 = vmatpush2.bf16.xpose.msra.mxu0 0
  %1168 = vmatprep.subr.bf16.mxu0 0
  %1169 = vmatpush2.bf16.xpose.msra.mxu0 0
  %1170 = vmatprep.subr.bf16.mxu0 0
  %1171 = vmatpush2.bf16.xpose.msra.mxu0 0
  %1172 = vmatprep.subr.bf16.mxu0 0
  %1173 = vmatpush2.bf16.xpose.msra.mxu0 0
  %1174 = vmatprep.subr.bf16.mxu0 0
  %1175 = vmatpush2.bf16.xpose.msra.mxu0 0
  %1176 = vmatprep.subr.bf16.mxu0 0
  %1177 = vmatpush2.bf16.xpose.msra.mxu0 0
  %1178 = vmatprep.mubr.bf16.mxu0 0
  %1179 = vmatmul.mubr.bf16.gmra.mxu0 %v1141
  %v1180 = vpop.f32.mrf.mxu0
  %v1181 = vadd.f32 0.0, %v1180
  %v1182 = vpop.f32.mrf.mxu0
  %v1183 = vpop.f32.mrf.mxu0
  %v1184 = vpop.f32.mrf.mxu0
  %1185 = vdwg.mxu0
  %v1186 = vmul.f32 %v1034, 0.25
  %v1187 = vmul.f32 %v1083, 0.25
  %v1188 = vmul.f32 %v1132, 0.25
  %v1189 = vmul.f32 %v1181, 0.25
  %v1190 = vadd.f32 %v1186, %v326
  %v1191 = vadd.f32 %v1187, %v330
  %v1192 = vadd.f32 %v1188, %v334
  %v1193 = vadd.f32 %v1189, %v338
  %v1194 = vsel %vm347, %v1190, -inf
  %1195 = vmax.xlane.f32.xlu0 %v1194
  %v1196 = vpop.xlane.xlu0 %1195
  %v1197 = vsel %vm347, %v1191, -inf
  %1198 = vmax.xlane.f32.xlu0 %v1197
  %v1199 = vpop.xlane.xlu0 %1198
  %v1200 = vsel %vm347, %v1192, -inf
  %1201 = vmax.xlane.f32.xlu0 %v1200
  %v1202 = vpop.xlane.xlu0 %1201
  %v1203 = vsel %vm347, %v1193, -inf
  %1204 = vmax.xlane.f32.xlu0 %v1203
  %v1205 = vpop.xlane.xlu0 %1204
  %v1206 = vsub.f32 %v1190, %v1196
  %v1207 = vsub.f32 %v1191, %v1199
  %v1208 = vsub.f32 %v1192, %v1202
  %v1209 = vsub.f32 %v1193, %v1205
  %v1210 = vmul.f32 %v1206, 1.442695
  %v1211 = vpow.pop %v1210
  %v1212 = vmul.f32 %v1207, 1.442695
  %v1213 = vpow.pop %v1212
  %v1214 = vmul.f32 %v1208, 1.442695
  %v1215 = vpow.pop %v1214
  %v1216 = vmul.f32 %v1209, 1.442695
  %v1217 = vpow.pop %v1216
  %v1218 = vsel %vm347, %v1211, 0.0
  %1219 = vadd.xlane.f32.xlu0 %v1218
  %v1220 = vpop.xlane.xlu0 %1219
  %v1221 = vsel %vm347, %v1213, 0.0
  %1222 = vadd.xlane.f32.xlu0 %v1221
  %v1223 = vpop.xlane.xlu0 %1222
  %v1224 = vsel %vm347, %v1215, 0.0
  %1225 = vadd.xlane.f32.xlu0 %v1224
  %v1226 = vpop.xlane.xlu0 %1225
  %v1227 = vsel %vm347, %v1217, 0.0
  %1228 = vadd.xlane.f32.xlu0 %v1227
  %v1229 = vpop.xlane.xlu0 %1228
  %v1230 = vrcp.pop %v1220
  %v1231 = vrcp.pop %v1223
  %v1232 = vrcp.pop %v1226
  %v1233 = vrcp.pop %v1229
  %v1234 = vmul.f32 %v1211, %v1230
  %v1235 = vmul.f32 %v1213, %v1231
  %v1236 = vmul.f32 %v1215, %v1232
  %v1237 = vmul.f32 %v1217, %v1233
  %v1238 = vpack.c.bf16 %v1234, %v1234
  %v1239 = vpack.c.bf16 %v1235, %v1235
  %v1240 = vpack.c.bf16 %v1236, %v1236
  %v1241 = vpack.c.bf16 %v1237, %v1237
  %1242 = vrot.lane.b32.xlu0 %v986, 64
  %v1243 = vpop.permute.xlu0 %1242
  %v1245 = vsel %vm347, %v1238, 0
  %v1248 = vsel %vm401, %v1243, 0
  %1250 = vmatprep.subr.bf16.mxu0 0
  %1251 = vmatpush1.bf16.msra.mxu0 0
  %1252 = vmatprep.subr.bf16.mxu0 0
  %1253 = vmatpush1.bf16.msra.mxu0 0
  %1254 = vmatprep.subr.bf16.mxu0 0
  %1255 = vmatpush1.bf16.msra.mxu0 0
  %1256 = vmatprep.subr.bf16.mxu0 0
  %1257 = vmatpush1.bf16.msra.mxu0 0
  %1258 = vmatprep.subr.bf16.mxu0 0
  %1259 = vmatpush1.bf16.msra.mxu0 0
  %1260 = vmatprep.subr.bf16.mxu0 0
  %1261 = vmatpush1.bf16.msra.mxu0 0
  %1262 = vmatprep.subr.bf16.mxu0 0
  %1263 = vmatpush1.bf16.msra.mxu0 0
  %1264 = vmatprep.subr.bf16.mxu0 0
  %1265 = vmatpush1.bf16.msra.mxu0 %v1248
  %1266 = vmatprep.subr.bf16.mxu0 0
  %1267 = vmatpush2.bf16.msra.mxu0 0
  %1268 = vmatprep.subr.bf16.mxu0 0
  %1269 = vmatpush2.bf16.msra.mxu0 0
  %1270 = vmatprep.subr.bf16.mxu0 0
  %1271 = vmatpush2.bf16.msra.mxu0 0
  %1272 = vmatprep.subr.bf16.mxu0 0
  %1273 = vmatpush2.bf16.msra.mxu0 0
  %1274 = vmatprep.subr.bf16.mxu0 0
  %1275 = vmatpush2.bf16.msra.mxu0 0
  %1276 = vmatprep.subr.bf16.mxu0 0
  %1277 = vmatpush2.bf16.msra.mxu0 0
  %1278 = vmatprep.subr.bf16.mxu0 0
  %1279 = vmatpush2.bf16.msra.mxu0 0
  %1280 = vmatprep.subr.bf16.mxu0 0
  %1281 = vmatpush2.bf16.msra.mxu0 0
  %1282 = vmatprep.mubr.bf16.mxu0 0
  %1283 = vmatmul.mubr.bf16.gmra.mxu0 %v1245
  %v1284 = vpop.f32.mrf.mxu0
  %v1285 = vadd.f32 0.0, %v1284
  %v1286 = vpop.f32.mrf.mxu0
  %v1287 = vpop.f32.mrf.mxu0
  %v1288 = vpop.f32.mrf.mxu0
  %1289 = vdwg.mxu0
  %1290 = vrot.lane.b32.xlu0 %v987, 64
  %v1291 = vpop.permute.xlu0 %1290
  %v1293 = vsel %vm347, %v1239, 0
  %v1296 = vsel %vm401, %v1291, 0
  %1298 = vmatprep.subr.bf16.mxu0 0
  %1299 = vmatpush1.bf16.msra.mxu0 0
  %1300 = vmatprep.subr.bf16.mxu0 0
  %1301 = vmatpush1.bf16.msra.mxu0 0
  %1302 = vmatprep.subr.bf16.mxu0 0
  %1303 = vmatpush1.bf16.msra.mxu0 0
  %1304 = vmatprep.subr.bf16.mxu0 0
  %1305 = vmatpush1.bf16.msra.mxu0 0
  %1306 = vmatprep.subr.bf16.mxu0 0
  %1307 = vmatpush1.bf16.msra.mxu0 0
  %1308 = vmatprep.subr.bf16.mxu0 0
  %1309 = vmatpush1.bf16.msra.mxu0 0
  %1310 = vmatprep.subr.bf16.mxu0 0
  %1311 = vmatpush1.bf16.msra.mxu0 0
  %1312 = vmatprep.subr.bf16.mxu0 0
  %1313 = vmatpush1.bf16.msra.mxu0 %v1296
  %1314 = vmatprep.subr.bf16.mxu0 0
  %1315 = vmatpush2.bf16.msra.mxu0 0
  %1316 = vmatprep.subr.bf16.mxu0 0
  %1317 = vmatpush2.bf16.msra.mxu0 0
  %1318 = vmatprep.subr.bf16.mxu0 0
  %1319 = vmatpush2.bf16.msra.mxu0 0
  %1320 = vmatprep.subr.bf16.mxu0 0
  %1321 = vmatpush2.bf16.msra.mxu0 0
  %1322 = vmatprep.subr.bf16.mxu0 0
  %1323 = vmatpush2.bf16.msra.mxu0 0
  %1324 = vmatprep.subr.bf16.mxu0 0
  %1325 = vmatpush2.bf16.msra.mxu0 0
  %1326 = vmatprep.subr.bf16.mxu0 0
  %1327 = vmatpush2.bf16.msra.mxu0 0
  %1328 = vmatprep.subr.bf16.mxu0 0
  %1329 = vmatpush2.bf16.msra.mxu0 0
  %1330 = vmatprep.mubr.bf16.mxu0 0
  %1331 = vmatmul.mubr.bf16.gmra.mxu0 %v1293
  %v1332 = vpop.f32.mrf.mxu0
  %v1333 = vadd.f32 0.0, %v1332
  %v1334 = vpop.f32.mrf.mxu0
  %v1335 = vpop.f32.mrf.mxu0
  %v1336 = vpop.f32.mrf.mxu0
  %1337 = vdwg.mxu0
  %1338 = vrot.lane.b32.xlu0 %v988, 64
  %v1339 = vpop.permute.xlu0 %1338
  %v1341 = vsel %vm347, %v1240, 0
  %v1344 = vsel %vm401, %v1339, 0
  %1346 = vmatprep.subr.bf16.mxu0 0
  %1347 = vmatpush1.bf16.msra.mxu0 0
  %1348 = vmatprep.subr.bf16.mxu0 0
  %1349 = vmatpush1.bf16.msra.mxu0 0
  %1350 = vmatprep.subr.bf16.mxu0 0
  %1351 = vmatpush1.bf16.msra.mxu0 0
  %1352 = vmatprep.subr.bf16.mxu0 0
  %1353 = vmatpush1.bf16.msra.mxu0 0
  %1354 = vmatprep.subr.bf16.mxu0 0
  %1355 = vmatpush1.bf16.msra.mxu0 0
  %1356 = vmatprep.subr.bf16.mxu0 0
  %1357 = vmatpush1.bf16.msra.mxu0 0
  %1358 = vmatprep.subr.bf16.mxu0 0
  %1359 = vmatpush1.bf16.msra.mxu0 0
  %1360 = vmatprep.subr.bf16.mxu0 0
  %1361 = vmatpush1.bf16.msra.mxu0 %v1344
  %1362 = vmatprep.subr.bf16.mxu0 0
  %1363 = vmatpush2.bf16.msra.mxu0 0
  %1364 = vmatprep.subr.bf16.mxu0 0
  %1365 = vmatpush2.bf16.msra.mxu0 0
  %1366 = vmatprep.subr.bf16.mxu0 0
  %1367 = vmatpush2.bf16.msra.mxu0 0
  %1368 = vmatprep.subr.bf16.mxu0 0
  %1369 = vmatpush2.bf16.msra.mxu0 0
  %1370 = vmatprep.subr.bf16.mxu0 0
  %1371 = vmatpush2.bf16.msra.mxu0 0
  %1372 = vmatprep.subr.bf16.mxu0 0
  %1373 = vmatpush2.bf16.msra.mxu0 0
  %1374 = vmatprep.subr.bf16.mxu0 0
  %1375 = vmatpush2.bf16.msra.mxu0 0
  %1376 = vmatprep.subr.bf16.mxu0 0
  %1377 = vmatpush2.bf16.msra.mxu0 0
  %1378 = vmatprep.mubr.bf16.mxu0 0
  %1379 = vmatmul.mubr.bf16.gmra.mxu0 %v1341
  %v1380 = vpop.f32.mrf.mxu0
  %v1381 = vadd.f32 0.0, %v1380
  %v1382 = vpop.f32.mrf.mxu0
  %v1383 = vpop.f32.mrf.mxu0
  %v1384 = vpop.f32.mrf.mxu0
  %1385 = vdwg.mxu0
  %1386 = vrot.lane.b32.xlu0 %v989, 64
  %v1387 = vpop.permute.xlu0 %1386
  %v1389 = vsel %vm347, %v1241, 0
  %v1392 = vsel %vm401, %v1387, 0
  %1394 = vmatprep.subr.bf16.mxu0 0
  %1395 = vmatpush1.bf16.msra.mxu0 0
  %1396 = vmatprep.subr.bf16.mxu0 0
  %1397 = vmatpush1.bf16.msra.mxu0 0
  %1398 = vmatprep.subr.bf16.mxu0 0
  %1399 = vmatpush1.bf16.msra.mxu0 0
  %1400 = vmatprep.subr.bf16.mxu0 0
  %1401 = vmatpush1.bf16.msra.mxu0 0
  %1402 = vmatprep.subr.bf16.mxu0 0
  %1403 = vmatpush1.bf16.msra.mxu0 0
  %1404 = vmatprep.subr.bf16.mxu0 0
  %1405 = vmatpush1.bf16.msra.mxu0 0
  %1406 = vmatprep.subr.bf16.mxu0 0
  %1407 = vmatpush1.bf16.msra.mxu0 0
  %1408 = vmatprep.subr.bf16.mxu0 0
  %1409 = vmatpush1.bf16.msra.mxu0 %v1392
  %1410 = vmatprep.subr.bf16.mxu0 0
  %1411 = vmatpush2.bf16.msra.mxu0 0
  %1412 = vmatprep.subr.bf16.mxu0 0
  %1413 = vmatpush2.bf16.msra.mxu0 0
  %1414 = vmatprep.subr.bf16.mxu0 0
  %1415 = vmatpush2.bf16.msra.mxu0 0
  %1416 = vmatprep.subr.bf16.mxu0 0
  %1417 = vmatpush2.bf16.msra.mxu0 0
  %1418 = vmatprep.subr.bf16.mxu0 0
  %1419 = vmatpush2.bf16.msra.mxu0 0
  %1420 = vmatprep.subr.bf16.mxu0 0
  %1421 = vmatpush2.bf16.msra.mxu0 0
  %1422 = vmatprep.subr.bf16.mxu0 0
  %1423 = vmatpush2.bf16.msra.mxu0 0
  %1424 = vmatprep.subr.bf16.mxu0 0
  %1425 = vmatpush2.bf16.msra.mxu0 0
  %1426 = vmatprep.mubr.bf16.mxu0 0
  %1427 = vmatmul.mubr.bf16.gmra.mxu0 %v1389
  %v1428 = vpop.f32.mrf.mxu0
  %v1429 = vadd.f32 0.0, %v1428
  %v1430 = vpop.f32.mrf.mxu0
  %v1431 = vpop.f32.mrf.mxu0
  %v1432 = vpop.f32.mrf.mxu0
  %1433 = vdwg.mxu0
  %1436 = vrot.lane.b32.xlu0 %v1381, 16
  %v1437 = vpop.permute.xlu0 %1436
  %1438 = vrot.lane.b32.xlu0 %v1429, 16
  %v1439 = vpop.permute.xlu0 %1438
  %v1442 = vsel %vm121, %v1285, %v1437
  %v1443 = vsel %vm121, %v1333, %v1439
  %v1444 = vpack.c.bf16 %v1443, %v1442
  %s1445 = scalar_lea.vmem %s3, 16
  %v1446 = vld [vmem:[%s1445] sm:$0xf]
  %v1447 = vld [vmem:[%s1445 + $0x4] sm:$0xf]
  %v1448 = vld [vmem:[%s1445 + $0x8] sm:$0xf]
  %v1449 = vld [vmem:[%s1445 + $0xc] sm:$0xf]
  %v1450 = vlaneseq
  %v1451 = vshrl.u32 %v1450, 7
  %v1452 = vsub.s32 1, %v1451
  %v1453 = vrot.slane %v911, %v1452
  %v1458 = vunpack.c.l.b16 %v1446
  %v1459 = vunpack.c.l.b16 %v1447
  %v1460 = vunpack.c.l.b16 %v1448
  %v1461 = vunpack.c.l.b16 %v1449
  %v1462 = vpack.c.b16 %v1459, %v1458
  %v1463 = vpack.c.b16 %v1461, %v1460
  %v1467 = vsel %vm61, %v1444, 0
  %1469 = vmatprep.subr.bf16.mxu0 0
  %1470 = vmatpush1.bf16.msra.mxu0 0
  %1471 = vmatprep.subr.bf16.mxu0 0
  %1472 = vmatpush1.bf16.msra.mxu0 0
  %1473 = vmatprep.subr.bf16.mxu0 0
  %1474 = vmatpush1.bf16.msra.mxu0 0
  %1475 = vmatprep.subr.bf16.mxu0 0
  %1476 = vmatpush1.bf16.msra.mxu0 0
  %1477 = vmatprep.subr.bf16.mxu0 0
  %1478 = vmatpush1.bf16.msra.mxu0 0
  %1479 = vmatprep.subr.bf16.mxu0 0
  %1480 = vmatpush1.bf16.msra.mxu0 0
  %1481 = vmatprep.subr.bf16.mxu0 0
  %1482 = vmatpush1.bf16.msra.mxu0 %v1463
  %1483 = vmatprep.subr.bf16.mxu0 0
  %1484 = vmatpush1.bf16.msra.mxu0 %v1462
  %1485 = vmatprep.subr.bf16.mxu0 0
  %1486 = vmatpush2.bf16.msra.mxu0 0
  %1487 = vmatprep.subr.bf16.mxu0 0
  %1488 = vmatpush2.bf16.msra.mxu0 0
  %1489 = vmatprep.subr.bf16.mxu0 0
  %1490 = vmatpush2.bf16.msra.mxu0 0
  %1491 = vmatprep.subr.bf16.mxu0 0
  %1492 = vmatpush2.bf16.msra.mxu0 0
  %1493 = vmatprep.subr.bf16.mxu0 0
  %1494 = vmatpush2.bf16.msra.mxu0 0
  %1495 = vmatprep.subr.bf16.mxu0 0
  %1496 = vmatpush2.bf16.msra.mxu0 0
  %1497 = vmatprep.subr.bf16.mxu0 0
  %1498 = vmatpush2.bf16.msra.mxu0 0
  %1499 = vmatprep.subr.bf16.mxu0 0
  %1500 = vmatpush2.bf16.msra.mxu0 0
  %1501 = vmatprep.mubr.bf16.mxu0 0
  %1502 = vmatmul.mubr.bf16.gmra.mxu0 %v1467
  %v1503 = vpop.f32.mrf.mxu0
  %v1504 = vadd.f32 %v1453, %v1503
  %v1505 = vpop.f32.mrf.mxu0
  %v1506 = vpop.f32.mrf.mxu0
  %v1507 = vadd.f32 %v1453, %v1506
  %v1508 = vpop.f32.mrf.mxu0
  %1509 = vdwg.mxu0
  %v1510 = vadd.f32 %v908, %v1504
  %v1511 = vadd.f32 %v909, %v1507
  %v1512 = vsel %vm61, %v1510, 0.0
  %1513 = vadd.xlane.f32.xlu0 %v1512
  %v1514 = vpop.xlane.xlu0 %1513
  %v1515 = vsel %vm61, %v1511, 0.0
  %1516 = vadd.xlane.f32.xlu0 %v1515
  %v1517 = vpop.xlane.xlu0 %1516
  %v1518 = vmul.f32 %v1514, %v672
  %v1519 = vmul.f32 %v1517, %v672
  %v1520 = vsub.f32 %v1510, %v1518
  %v1521 = vsub.f32 %v1511, %v1519
  %v1522 = vmul.f32 %v1520, %v1520
  %v1523 = vmul.f32 %v1521, %v1521
  %v1524 = vsel %vm61, %v1522, 0.0
  %1525 = vadd.xlane.f32.xlu0 %v1524
  %v1526 = vpop.xlane.xlu0 %1525
  %v1527 = vsel %vm61, %v1523, 0.0
  %1528 = vadd.xlane.f32.xlu0 %v1527
  %v1529 = vpop.xlane.xlu0 %1528
  %v1530 = vmul.f32 %v1526, %v672
  %v1531 = vmul.f32 %v1529, %v672
  %v1532 = vadd.f32 %v1530, 1e-12
  %v1533 = vadd.f32 %v1531, 1e-12
  %v1534 = vrsqrt.pop %v1532
  %v1535 = vrsqrt.pop %v1533
  %v1536 = vmul.f32 %v1520, %v1534
  %v1537 = vmul.f32 %v1521, %v1535
  %v1538 = vlaneseq
  %v1539 = vshrl.u32 %v1538, 7
  %v1540 = vsub.s32 2, %v1539
  %v1541 = vrot.slane %v911, %v1540
  %v1542 = vmul.f32 %v1536, %v1541
  %v1543 = vmul.f32 %v1537, %v1541
  %v1544 = vlaneseq
  %v1545 = vshrl.u32 %v1544, 7
  %v1546 = vsub.s32 3, %v1545
  %v1547 = vrot.slane %v911, %v1546
  %v1548 = vadd.f32 %v1542, %v1547
  %v1549 = vadd.f32 %v1543, %v1547
  %v1550 = vpack.c.bf16 %v1549, %v1548
  %s1551 = scalar_lea.vmem %s4, 16
  %v1552 = vld [vmem:[%s1551] sm:$0xf]
  %v1553 = vld [vmem:[%s1551 + $0x4] sm:$0xf]
  %v1554 = vld [vmem:[%s1551 + $0x8] sm:$0xf]
  %v1555 = vld [vmem:[%s1551 + $0xc] sm:$0xf]
  %v1556 = vlaneseq
  %v1557 = vshrl.u32 %v1556, 7
  %v1558 = vsub.s32 4, %v1557
  %v1559 = vrot.slane %v911, %v1558
  %v1564 = vunpack.c.l.b16 %v1552
  %v1565 = vunpack.c.l.b16 %v1553
  %v1566 = vunpack.c.l.b16 %v1554
  %v1567 = vunpack.c.l.b16 %v1555
  %v1568 = vpack.c.b16 %v1565, %v1564
  %v1569 = vpack.c.b16 %v1567, %v1566
  %v1573 = vsel %vm61, %v1550, 0
  %1575 = vmatprep.subr.bf16.mxu0 0
  %1576 = vmatpush1.bf16.msra.mxu0 0
  %1577 = vmatprep.subr.bf16.mxu0 0
  %1578 = vmatpush1.bf16.msra.mxu0 0
  %1579 = vmatprep.subr.bf16.mxu0 0
  %1580 = vmatpush1.bf16.msra.mxu0 0
  %1581 = vmatprep.subr.bf16.mxu0 0
  %1582 = vmatpush1.bf16.msra.mxu0 0
  %1583 = vmatprep.subr.bf16.mxu0 0
  %1584 = vmatpush1.bf16.msra.mxu0 0
  %1585 = vmatprep.subr.bf16.mxu0 0
  %1586 = vmatpush1.bf16.msra.mxu0 0
  %1587 = vmatprep.subr.bf16.mxu0 0
  %1588 = vmatpush1.bf16.msra.mxu0 %v1569
  %1589 = vmatprep.subr.bf16.mxu0 0
  %1590 = vmatpush1.bf16.msra.mxu0 %v1568
  %1591 = vmatprep.subr.bf16.mxu0 0
  %1592 = vmatpush2.bf16.msra.mxu0 0
  %1593 = vmatprep.subr.bf16.mxu0 0
  %1594 = vmatpush2.bf16.msra.mxu0 0
  %1595 = vmatprep.subr.bf16.mxu0 0
  %1596 = vmatpush2.bf16.msra.mxu0 0
  %1597 = vmatprep.subr.bf16.mxu0 0
  %1598 = vmatpush2.bf16.msra.mxu0 0
  %1599 = vmatprep.subr.bf16.mxu0 0
  %1600 = vmatpush2.bf16.msra.mxu0 0
  %1601 = vmatprep.subr.bf16.mxu0 0
  %1602 = vmatpush2.bf16.msra.mxu0 0
  %1603 = vmatprep.subr.bf16.mxu0 0
  %1604 = vmatpush2.bf16.msra.mxu0 0
  %1605 = vmatprep.subr.bf16.mxu0 0
  %1606 = vmatpush2.bf16.msra.mxu0 0
  %1607 = vmatprep.mubr.bf16.mxu0 0
  %1608 = vmatmul.mubr.bf16.gmra.mxu0 %v1573
  %v1609 = vpop.f32.mrf.mxu0
  %v1610 = vadd.f32 %v1559, %v1609
  %v1611 = vpop.f32.mrf.mxu0
  %v1612 = vpop.f32.mrf.mxu0
  %v1613 = vadd.f32 %v1559, %v1612
  %v1614 = vpop.f32.mrf.mxu0
  %1615 = vdwg.mxu0
  %v1616 = vmul.f32 %v1610, %v1610
  %v1617 = vmul.f32 %v1613, %v1613
  %v1618 = vmul.f32 %v1610, %v1616
  %v1619 = vmul.f32 %v1613, %v1617
  %v1620 = vmul.f32 %v1618, 0.044715
  %v1621 = vmul.f32 %v1619, 0.044715
  %v1622 = vadd.f32 %v1610, %v1620
  %v1623 = vadd.f32 %v1613, %v1621
  %v1624 = vmul.f32 %v1622, 0.7978846
  %v1625 = vmul.f32 %v1623, 0.7978846
  %v1626 = vtanh.pop %v1624
  %v1627 = vtanh.pop %v1625
  %v1628 = vadd.f32 %v1626, 1.0
  %v1629 = vadd.f32 %v1627, 1.0
  %v1630 = vmul.f32 %v1628, 0.5
  %v1631 = vmul.f32 %v1629, 0.5
  %v1632 = vmul.f32 %v1610, %v1630
  %v1633 = vmul.f32 %v1613, %v1631
  %v1634 = vpack.c.bf16 %v1633, %v1632
  %s1635 = scalar_lea.vmem %s5, 32
  %v1636 = vld [vmem:[%s1635] sm:$0xf]
  %v1637 = vld [vmem:[%s1635 + $0x4] sm:$0xf]
  %v1638 = vld [vmem:[%s1635 + $0x8] sm:$0xf]
  %v1639 = vld [vmem:[%s1635 + $0xc] sm:$0xf]
  %v1640 = vld [vmem:[%s1635 + $0x10] sm:$0xf]
  %v1641 = vld [vmem:[%s1635 + $0x14] sm:$0xf]
  %v1642 = vld [vmem:[%s1635 + $0x18] sm:$0xf]
  %v1643 = vld [vmem:[%s1635 + $0x1c] sm:$0xf]
  %v1644 = vlaneseq
  %v1645 = vshrl.u32 %v1644, 7
  %v1646 = vsub.s32 5, %v1645
  %v1647 = vrot.slane %v911, %v1646
  %v1656 = vunpack.c.l.b16 %v1636
  %v1657 = vunpack.c.l.b16 %v1637
  %v1658 = vunpack.c.l.b16 %v1638
  %v1659 = vunpack.c.l.b16 %v1639
  %v1660 = vunpack.c.l.b16 %v1640
  %v1661 = vunpack.c.l.b16 %v1641
  %v1662 = vunpack.c.l.b16 %v1642
  %v1663 = vunpack.c.l.b16 %v1643
  %v1664 = vpack.c.b16 %v1657, %v1656
  %v1665 = vpack.c.b16 %v1659, %v1658
  %v1666 = vpack.c.b16 %v1661, %v1660
  %v1667 = vpack.c.b16 %v1663, %v1662
  %v1673 = vsel %vm825, %v1634, 0
  %1675 = vmatprep.subr.bf16.mxu0 0
  %1676 = vmatpush1.bf16.msra.mxu0 0
  %1677 = vmatprep.subr.bf16.mxu0 0
  %1678 = vmatpush1.bf16.msra.mxu0 0
  %1679 = vmatprep.subr.bf16.mxu0 0
  %1680 = vmatpush1.bf16.msra.mxu0 0
  %1681 = vmatprep.subr.bf16.mxu0 0
  %1682 = vmatpush1.bf16.msra.mxu0 0
  %1683 = vmatprep.subr.bf16.mxu0 0
  %1684 = vmatpush1.bf16.msra.mxu0 %v1667
  %1685 = vmatprep.subr.bf16.mxu0 0
  %1686 = vmatpush1.bf16.msra.mxu0 %v1666
  %1687 = vmatprep.subr.bf16.mxu0 0
  %1688 = vmatpush1.bf16.msra.mxu0 %v1665
  %1689 = vmatprep.subr.bf16.mxu0 0
  %1690 = vmatpush1.bf16.msra.mxu0 %v1664
  %1691 = vmatprep.subr.bf16.mxu0 0
  %1692 = vmatpush2.bf16.msra.mxu0 0
  %1693 = vmatprep.subr.bf16.mxu0 0
  %1694 = vmatpush2.bf16.msra.mxu0 0
  %1695 = vmatprep.subr.bf16.mxu0 0
  %1696 = vmatpush2.bf16.msra.mxu0 0
  %1697 = vmatprep.subr.bf16.mxu0 0
  %1698 = vmatpush2.bf16.msra.mxu0 0
  %1699 = vmatprep.subr.bf16.mxu0 0
  %1700 = vmatpush2.bf16.msra.mxu0 0
  %1701 = vmatprep.subr.bf16.mxu0 0
  %1702 = vmatpush2.bf16.msra.mxu0 0
  %1703 = vmatprep.subr.bf16.mxu0 0
  %1704 = vmatpush2.bf16.msra.mxu0 0
  %1705 = vmatprep.subr.bf16.mxu0 0
  %1706 = vmatpush2.bf16.msra.mxu0 0
  %1707 = vmatprep.mubr.bf16.mxu0 0
  %1708 = vmatmul.mubr.bf16.gmra.mxu0 %v1673
  %v1709 = vpop.f32.mrf.mxu0
  %v1710 = vadd.f32 %v1647, %v1709
  %v1711 = vpop.f32.mrf.mxu0
  %v1712 = vpop.f32.mrf.mxu0
  %v1713 = vadd.f32 %v1647, %v1712
  %v1714 = vpop.f32.mrf.mxu0
  %1715 = vdwg.mxu0
  %v1716 = vadd.f32 %v1548, %v1710
  %v1717 = vadd.f32 %v1549, %v1713
  %v1718 = vsel %vm61, %v1716, 0.0
  %1719 = vadd.xlane.f32.xlu0 %v1718
  %v1720 = vpop.xlane.xlu0 %1719
  %v1721 = vsel %vm61, %v1717, 0.0
  %1722 = vadd.xlane.f32.xlu0 %v1721
  %v1723 = vpop.xlane.xlu0 %1722
  %v1724 = vmul.f32 %v1720, %v672
  %v1725 = vmul.f32 %v1723, %v672
  %v1726 = vsub.f32 %v1716, %v1724
  %v1727 = vsub.f32 %v1717, %v1725
  %v1728 = vmul.f32 %v1726, %v1726
  %v1729 = vmul.f32 %v1727, %v1727
  %v1730 = vsel %vm61, %v1728, 0.0
  %1731 = vadd.xlane.f32.xlu0 %v1730
  %v1732 = vpop.xlane.xlu0 %1731
  %v1733 = vsel %vm61, %v1729, 0.0
  %1734 = vadd.xlane.f32.xlu0 %v1733
  %v1735 = vpop.xlane.xlu0 %1734
  %v1736 = vmul.f32 %v1732, %v672
  %v1737 = vmul.f32 %v1735, %v672
  %v1738 = vadd.f32 %v1736, 1e-12
  %v1739 = vadd.f32 %v1737, 1e-12
  %v1740 = vrsqrt.pop %v1738
  %v1741 = vrsqrt.pop %v1739
  %v1742 = vmul.f32 %v1726, %v1740
  %v1743 = vmul.f32 %v1727, %v1741
  %v1744 = vlaneseq
  %v1745 = vshrl.u32 %v1744, 7
  %v1746 = vsub.s32 6, %v1745
  %v1747 = vrot.slane %v911, %v1746
  %v1748 = vmul.f32 %v1742, %v1747
  %v1749 = vmul.f32 %v1743, %v1747
  %v1750 = vlaneseq
  %v1751 = vshrl.u32 %v1750, 7
  %v1752 = vsub.s32 7, %v1751
  %v1753 = vrot.slane %v911, %v1752
  %v1754 = vadd.f32 %v1748, %v1753
  %v1755 = vadd.f32 %v1749, %v1753
  %v1757 = vrot.slane %v1755, 7
  %vm1759 = vcmask 1040384
  %v1760 = vsel %vm1759, %v1754, %v1757
  %v1761 = vld [vmem:[%s7] sm:$0xf]
  %v1762 = vld [vmem:[%s7 + $0x4] sm:$0xf]
  %v1763 = vld [vmem:[%s7 + $0x8] sm:$0xf]
  %v1764 = vld [vmem:[%s7 + $0xc] sm:$0xf]
  %v1765 = vld [vmem:[%s8] sm:$0x1]
  %v1766 = vpack.c.bf16 %v1760, %v1760
  %v1768 = vlaneseq
  %v1769 = vshrl.u32 %v1768, 7
  %v1770 = vsub.s32 0, %v1769
  %v1771 = vrot.slane %v1765, %v1770
  %v1777 = vunpack.c.l.b16 %v1761
  %v1778 = vunpack.c.l.b16 %v1762
  %v1779 = vunpack.c.l.b16 %v1763
  %v1780 = vunpack.c.l.b16 %v1764
  %v1781 = vpack.c.b16 %v1778, %v1777
  %v1782 = vpack.c.b16 %v1780, %v1779
  %v1786 = vsel %vm61, %v1766, 0
  %1788 = vmatprep.subr.bf16.mxu0 0
  %1789 = vmatpush1.bf16.msra.mxu0 0
  %1790 = vmatprep.subr.bf16.mxu0 0
  %1791 = vmatpush1.bf16.msra.mxu0 0
  %1792 = vmatprep.subr.bf16.mxu0 0
  %1793 = vmatpush1.bf16.msra.mxu0 0
  %1794 = vmatprep.subr.bf16.mxu0 0
  %1795 = vmatpush1.bf16.msra.mxu0 0
  %1796 = vmatprep.subr.bf16.mxu0 0
  %1797 = vmatpush1.bf16.msra.mxu0 0
  %1798 = vmatprep.subr.bf16.mxu0 0
  %1799 = vmatpush1.bf16.msra.mxu0 0
  %1800 = vmatprep.subr.bf16.mxu0 0
  %1801 = vmatpush1.bf16.msra.mxu0 %v1782
  %1802 = vmatprep.subr.bf16.mxu0 0
  %1803 = vmatpush1.bf16.msra.mxu0 %v1781
  %1804 = vmatprep.subr.bf16.mxu0 0
  %1805 = vmatpush2.bf16.msra.mxu0 0
  %1806 = vmatprep.subr.bf16.mxu0 0
  %1807 = vmatpush2.bf16.msra.mxu0 0
  %1808 = vmatprep.subr.bf16.mxu0 0
  %1809 = vmatpush2.bf16.msra.mxu0 0
  %1810 = vmatprep.subr.bf16.mxu0 0
  %1811 = vmatpush2.bf16.msra.mxu0 0
  %1812 = vmatprep.subr.bf16.mxu0 0
  %1813 = vmatpush2.bf16.msra.mxu0 0
  %1814 = vmatprep.subr.bf16.mxu0 0
  %1815 = vmatpush2.bf16.msra.mxu0 0
  %1816 = vmatprep.subr.bf16.mxu0 0
  %1817 = vmatpush2.bf16.msra.mxu0 0
  %1818 = vmatprep.subr.bf16.mxu0 0
  %1819 = vmatpush2.bf16.msra.mxu0 0
  %1820 = vmatprep.mubr.bf16.mxu0 0
  %1821 = vmatmul.mubr.bf16.gmra.mxu0 %v1786
  %v1822 = vpop.f32.mrf.mxu0
  %v1823 = vadd.f32 %v1771, %v1822
  %v1824 = vpop.f32.mrf.mxu0
  %v1825 = vpop.f32.mrf.mxu0
  %v1826 = vpop.f32.mrf.mxu0
  %1827 = vdwg.mxu0
  %v1828 = vtanh.pop %v1823
  %v1829 = vpack.c.bf16 %v1828, %v1828
  %1830 = vrot.lane.b32.xlu0 %v1781, 96
  %v1831 = vpop.permute.xlu0 %1830
  %1832 = vrot.lane.b32.xlu0 %v1782, 96
  %v1833 = vpop.permute.xlu0 %1832
  %1836 = vrot.lane.b32.xlu0 %v1771, 96
  %v1837 = vpop.permute.xlu0 %1836
  %v1840 = vsel %vm61, %v1829, 0
  %1842 = vmatprep.subr.bf16.mxu0 0
  %1843 = vmatpush1.bf16.msra.mxu0 0
  %1844 = vmatprep.subr.bf16.mxu0 0
  %1845 = vmatpush1.bf16.msra.mxu0 0
  %1846 = vmatprep.subr.bf16.mxu0 0
  %1847 = vmatpush1.bf16.msra.mxu0 0
  %1848 = vmatprep.subr.bf16.mxu0 0
  %1849 = vmatpush1.bf16.msra.mxu0 0
  %1850 = vmatprep.subr.bf16.mxu0 0
  %1851 = vmatpush1.bf16.msra.mxu0 0
  %1852 = vmatprep.subr.bf16.mxu0 0
  %1853 = vmatpush1.bf16.msra.mxu0 0
  %1854 = vmatprep.subr.bf16.mxu0 0
  %1855 = vmatpush1.bf16.msra.mxu0 %v1833
  %1856 = vmatprep.subr.bf16.mxu0 0
  %1857 = vmatpush1.bf16.msra.mxu0 %v1831
  %1858 = vmatprep.subr.bf16.mxu0 0
  %1859 = vmatpush2.bf16.msra.mxu0 0
  %1860 = vmatprep.subr.bf16.mxu0 0
  %1861 = vmatpush2.bf16.msra.mxu0 0
  %1862 = vmatprep.subr.bf16.mxu0 0
  %1863 = vmatpush2.bf16.msra.mxu0 0
  %1864 = vmatprep.subr.bf16.mxu0 0
  %1865 = vmatpush2.bf16.msra.mxu0 0
  %1866 = vmatprep.subr.bf16.mxu0 0
  %1867 = vmatpush2.bf16.msra.mxu0 0
  %1868 = vmatprep.subr.bf16.mxu0 0
  %1869 = vmatpush2.bf16.msra.mxu0 0
  %1870 = vmatprep.subr.bf16.mxu0 0
  %1871 = vmatpush2.bf16.msra.mxu0 0
  %1872 = vmatprep.subr.bf16.mxu0 0
  %1873 = vmatpush2.bf16.msra.mxu0 0
  %1874 = vmatprep.mubr.bf16.mxu0 0
  %1875 = vmatmul.mubr.bf16.gmra.mxu0 %v1840
  %v1876 = vpop.f32.mrf.mxu0
  %v1877 = vadd.f32 %v1837, %v1876
  %v1878 = vpop.f32.mrf.mxu0
  %v1879 = vpop.f32.mrf.mxu0
  %v1880 = vpop.f32.mrf.mxu0
  %1881 = vdwg.mxu0
  %vm1882 = vcmask 9216
  %1883 = vst.msk [vmem:[%s9] sm:$0x3] %vm1882, %v1877
  // Predicated region
  $region38: #{indic_bert_classifier_forward.1} parent=0 // pred_check
    _
  $region39: #{indic_bert_classifier_forward.1} parent=0 // pred_check_branch
    %1885 = sbr.rel (0) target = $region41
  $region40: #{indic_bert_classifier_forward.1} parent=0 // pred_region
    _
  $region41: #{indic_bert_classifier_forward.1} parent=0 // pred_fallthru
    _
  // Predicated region
  $region42: #{indic_bert_classifier_forward.1} parent=0 // pred_check
    _
  $region43: #{indic_bert_classifier_forward.1} parent=0 // pred_check_branch
    %1887 = sbr.rel (0) target = $region45
  $region44: #{indic_bert_classifier_forward.1} parent=0 // pred_region
    _
  $region45: #{indic_bert_classifier_forward.1} parent=0 // pred_fallthru
    _

</llo_original>
